<compile_context>
chip_gen: v6e
topology: v6e:2x2x1
jax: 0.10.0
libtpu: 0.0.40
codegen_flags: <defaults>
</compile_context>

<pallas_src>
import functools

import jax
import jax.numpy as jnp
from jax.experimental import pallas as pl
from jax.experimental.pallas import tpu as pltpu

NLAYERS = 3
NCHANNELS = 16
C = NCHANNELS


# --------------------------------------------------------------------------
# In-kernel helpers
# --------------------------------------------------------------------------
def _interleave_phases(even, odd):
    """(C, Lh),(C, Lh) -> (C, 2*Lh): out[:, 2t] = even[:, t], out[:, 2t+1] = odd[:, t].

    Implemented as two matmuls against iota-built 0/1 selection matrices — this is
    layout-robust on TPU (no vector reshape or strided lane store) and runs on the
    MXU, leaving the VPU free.
    """
    Lh = even.shape[1]
    row = jax.lax.broadcasted_iota(jnp.int32, (Lh, 2 * Lh), 0)
    col = jax.lax.broadcasted_iota(jnp.int32, (Lh, 2 * Lh), 1)
    sel_e = (col == 2 * row).astype(even.dtype)
    sel_o = (col == 2 * row + 1).astype(odd.dtype)
    return (jnp.dot(even, sel_e, preferred_element_type=jnp.float32)
            + jnp.dot(odd, sel_o, preferred_element_type=jnp.float32))


def _fold_taps(pad_ref, xcol_ref, n_ch, length, start, n_taps):
    """Write n_taps shifted (n_ch, length) views of pad_ref into xcol rows (im2col)."""
    for k in range(n_taps):
        xcol_ref[k * n_ch:(k + 1) * n_ch, 0:length] = (
            pad_ref[:, start + k:start + k + length])


# --------------------------------------------------------------------------
# Fused decoder kernel: one grid step = full decoder for one batch sample
# --------------------------------------------------------------------------
def _decoder_kernel(x_ref,
                    wE0_ref, wO0_ref, bT0_ref, wC0_ref, bC0_ref,
                    wT1_ref, bT1_ref, wC1_ref, bC1_ref,
                    wF_ref, bF_ref,
                    o_ref,
                    pad0_ref, padh_ref, xcol_ref,
                    *, L):
    f32 = jnp.float32
    L1, L2 = 2 * L, 4 * L

    # ---- Layer 0: ConvTranspose1d(1 -> C), polyphase, VPU broadcast MACs ----
    pad0_ref[...] = jnp.zeros_like(pad0_ref)
    pad0_ref[:, 1:L + 1] = x_ref[...].astype(f32)          # [0, x, 0]
    wE0 = wE0_ref[...]                                     # (C, 3)
    wO0 = wO0_ref[...]                                     # (C, 2)
    bT0 = bT0_ref[...]                                     # (C, 1)
    even = (wE0[:, 0:1] * pad0_ref[:, 0:L]
            + wE0[:, 1:2] * pad0_ref[:, 1:L + 1]
            + wE0[:, 2:3] * pad0_ref[:, 2:L + 2]) + bT0
    odd = (wO0[:, 0:1] * pad0_ref[:, 1:L + 1]
           + wO0[:, 1:2] * pad0_ref[:, 2:L + 2]) + bT0
    h = _interleave_phases(jnp.maximum(even, 0.0),
                           jnp.maximum(odd, 0.0))          # (C, 2L)

    # Zero the big pad scratch once per sample; interior is always overwritten
    # before being read, so only the edge columns rely on this.
    padh_ref[...] = jnp.zeros_like(padh_ref)

    # ---- Conv1d(C -> C, k=3, p=1): folded-K (48) MXU matmul ----
    padh_ref[:, 1:L1 + 1] = h
    _fold_taps(padh_ref, xcol_ref, C, L1, 0, 3)
    h = jnp.dot(wC0_ref[...], xcol_ref[0:3 * C, 0:L1],
                preferred_element_type=f32) + bC0_ref[...]

    # ---- Layer 1: ConvTranspose1d(C -> C), both phases in ONE stacked matmul ----
    padh_ref[:, 1:L1 + 1] = h
    _fold_taps(padh_ref, xcol_ref, C, L1, 0, 3)
    eo = jnp.dot(wT1_ref[...], xcol_ref[0:3 * C, 0:L1],
                 preferred_element_type=f32) + bT1_ref[...]   # (2C, 2L)
    eo = jnp.maximum(eo, 0.0)
    h = _interleave_phases(eo[0:C, :], eo[C:2 * C, :])         # (C, 4L)

    # ---- Conv1d(C -> C, k=3, p=1) ----
    padh_ref[:, 1:L2 + 1] = h
    _fold_taps(padh_ref, xcol_ref, C, L2, 0, 3)
    h = jnp.dot(wC1_ref[...], xcol_ref[0:3 * C, 0:L2],
                preferred_element_type=f32) + bC1_ref[...]

    # ---- Final Conv1d(C -> 1, k=3, p=1): lane-dense (1, 4L) output ----
    padh_ref[:, 1:L2 + 1] = h
    _fold_taps(padh_ref, xcol_ref, C, L2, 0, 3)
    y = jnp.dot(wF_ref[...], xcol_ref[0:3 * C, 0:L2],
                preferred_element_type=f32) + bF_ref[...]

    o_ref[...] = y.astype(o_ref.dtype)


# --------------------------------------------------------------------------
# One-time weight re-layout (outside the per-call path)
# --------------------------------------------------------------------------
def prepare_params(params):
    """Polyphase split / stack / flatten the PyTorch-layout weights once.

    ConvTranspose1d(k=5, p=2, s=2, op=1) polyphase taps (w in (Cin, Cout, 5)):
      even:  y[2t]   = sum_ci x[t-1]*w[ci,co,4] + x[t]*w[ci,co,2] + x[t+1]*w[ci,co,0]
      odd :  y[2t+1] = sum_ci x[t]  *w[ci,co,3] + x[t+1]*w[ci,co,1]
    Flat layout: flat[co, k*Cin + ci] so it matmuls against the im2col rows
    (im2col row-block k holds x[t+k-1]).
    For the 16->16 transpose conv, even and odd phase weights are stacked along the
    output-channel axis (odd zero-padded onto the 3-tap grid) so both phases come
    out of a single (2C, 3C) @ (3C, L) matmul.
    """
    prep = {}

    # Layer 0 transpose conv (Cin=1): small per-tap vectors for VPU broadcast MACs.
    wt0 = params["convT0_w"]                                       # (1, C, 5)
    taps_e0 = jnp.stack([wt0[:, :, 4], wt0[:, :, 2], wt0[:, :, 0]], axis=0)  # (3,1,C)
    taps_o0 = jnp.stack([wt0[:, :, 3], wt0[:, :, 1]], axis=0)                # (2,1,C)
    prep["wE0"] = jnp.transpose(taps_e0, (2, 0, 1)).reshape(C, 3)
    prep["wO0"] = jnp.transpose(taps_o0, (2, 0, 1)).reshape(C, 2)
    prep["bT0"] = params["convT0_b"].reshape(C, 1)

    # Conv1d after layer 0.
    wc0 = params["conv0_w"]                                        # (C, C, 3)
    prep["wC0"] = jnp.transpose(wc0, (0, 2, 1)).reshape(C, 3 * C)
    prep["bC0"] = params["conv0_b"].reshape(C, 1)

    # Layer 1 transpose conv (Cin=C): stacked even/odd phase weights.
    wt1 = params["convT1_w"]                                       # (C, C, 5)
    taps_e1 = jnp.stack([wt1[:, :, 4], wt1[:, :, 2], wt1[:, :, 0]], axis=0)  # (3,C,C)
    zeros_tap = jnp.zeros_like(wt1[:, :, 0])
    taps_o1 = jnp.stack([zeros_tap, wt1[:, :, 3], wt1[:, :, 1]], axis=0)     # (3,C,C)
    wE1 = jnp.transpose(taps_e1, (2, 0, 1)).reshape(C, 3 * C)
    wO1 = jnp.transpose(taps_o1, (2, 0, 1)).reshape(C, 3 * C)
    prep["wT1"] = jnp.concatenate([wE1, wO1], axis=0)              # (2C, 3C)
    bT1 = params["convT1_b"].reshape(C, 1)
    prep["bT1"] = jnp.concatenate([bT1, bT1], axis=0)              # (2C, 1)

    # Conv1d after layer 1.
    wc1 = params["conv1_w"]                                        # (C, C, 3)
    prep["wC1"] = jnp.transpose(wc1, (0, 2, 1)).reshape(C, 3 * C)
    prep["bC1"] = params["conv1_b"].reshape(C, 1)

    # Final Conv1d(C -> 1).
    wf = params["final_w"]                                         # (1, C, 3)
    prep["wF"] = jnp.transpose(wf, (0, 2, 1)).reshape(1, 3 * C)
    prep["bF"] = params["final_b"].reshape(1, 1)

    return {k: v.astype(jnp.float32) for k, v in prep.items()}


# --------------------------------------------------------------------------
# Forward pass: one fused pallas_call
# --------------------------------------------------------------------------
def my_decoder_forward(x, prep):
    if x.ndim == 2:
        B, L = x.shape
        x = x.reshape(B, 1, L)
    else:
        B, _, L = x.shape
    L_out = 4 * L

    kernel = functools.partial(_decoder_kernel, L=L)

    def const(shape):
        return pl.BlockSpec(shape, lambda b: (0,) * len(shape))

    return pl.pallas_call(
        kernel,
        out_shape=jax.ShapeDtypeStruct((B, 1, L_out), jnp.float32),
        grid=(B,),
        in_specs=[
            pl.BlockSpec((None, 1, L), lambda b: (b, 0, 0)),       # x -> (1, L)
            const((C, 3)), const((C, 2)), const((C, 1)),           # wE0, wO0, bT0
            const((C, 3 * C)), const((C, 1)),                      # wC0, bC0
            const((2 * C, 3 * C)), const((2 * C, 1)),              # wT1 (stacked), bT1
            const((C, 3 * C)), const((C, 1)),                      # wC1, bC1
            const((1, 3 * C)), const((1, 1)),                      # wF, bF
        ],
        out_specs=pl.BlockSpec((None, 1, L_out), lambda b: (b, 0, 0)),
        scratch_shapes=[
            pltpu.VMEM((1, L + 2), jnp.float32),         # padded layer-0 input
            pltpu.VMEM((C, L_out + 2), jnp.float32),     # padded activation (reused)
            pltpu.VMEM((3 * C, L_out), jnp.float32),     # im2col taps (reused)
        ],
        compiler_params=pltpu.CompilerParams(
            dimension_semantics=("parallel",)),
    )(x.astype(jnp.float32),
      prep["wE0"], prep["wO0"], prep["bT0"], prep["wC0"], prep["bC0"],
      prep["wT1"], prep["bT1"], prep["wC1"], prep["bC1"],
      prep["wF"], prep["bF"])


# --------------------------------------------------------------------------
# Pure-JAX reference (lax conv) for a numeric sanity check
# --------------------------------------------------------------------------
def ref_forward(x, params):
    dn = ("NCH", "OIH", "NCH")
    if x.ndim == 2:
        x = x[:, None, :]
    for i in range(NLAYERS - 1):
        wt, bt = params[f"convT{i}_w"], params[f"convT{i}_b"]
        w = jnp.transpose(wt, (1, 0, 2))[:, :, ::-1]               # (Cout, Cin, K)
        x = jax.lax.conv_general_dilated(
            x, w, window_strides=(1,), padding=[(2, 3)],
            lhs_dilation=(2,), dimension_numbers=dn) + bt[None, :, None]
        x = jnp.maximum(x, 0.0)
        wc, bc = params[f"conv{i}_w"], params[f"conv{i}_b"]
        x = jax.lax.conv_general_dilated(
            x, wc, window_strides=(1,), padding=[(1, 1)],
            dimension_numbers=dn) + bc[None, :, None]
    wf, bf = params["final_w"], params["final_b"]
    x = jax.lax.conv_general_dilated(
        x, wf, window_strides=(1,), padding=[(1, 1)],
        dimension_numbers=dn) + bf[None, :, None]
    return x


# --------------------------------------------------------------------------
# Deterministic parameter init (shapes dictated by __init__)
# --------------------------------------------------------------------------
def init_params(key):
    params = {}
    ks = jax.random.split(key, 10)
    j = 0
    for i in range(NLAYERS - 1):
        cin = 1 if i == 0 else NCHANNELS
        params[f"convT{i}_w"] = 0.1 * jax.random.normal(
            ks[j], (cin, NCHANNELS, 5), jnp.float32); j += 1
        params[f"convT{i}_b"] = 0.1 * jax.random.normal(
            ks[j], (NCHANNELS,), jnp.float32); j += 1
        params[f"conv{i}_w"] = 0.1 * jax.random.normal(
            ks[j], (NCHANNELS, NCHANNELS, 3), jnp.float32); j += 1
        params[f"conv{i}_b"] = 0.1 * jax.random.normal(
            ks[j], (NCHANNELS,), jnp.float32); j += 1
    params["final_w"] = 0.1 * jax.random.normal(
        ks[j], (1, NCHANNELS, 3), jnp.float32); j += 1
    params["final_b"] = 0.1 * jax.random.normal(
        ks[j], (1,), jnp.float32)
    return params


if __name__ == "__main__":
    key = jax.random.PRNGKey(0)
    kp, kx = jax.random.split(key)
    params = init_params(kp)
    prep = prepare_params(params)          # one-time weight re-layout

    B, L = 2, 64
    x = jax.random.normal(kx, (B, L), jnp.float32)   # 2D input, like the module

    fwd = jax.jit(my_decoder_forward)
    out = jax.block_until_ready(fwd(x, prep))
    assert out.shape == (B, 1, 4 * L), out.shape

    ref = jax.block_until_ready(ref_forward(x, params))
    assert jnp.allclose(out, ref, rtol=1e-4, atol=1e-4), float(
        jnp.max(jnp.abs(out - ref)))

    print("KERNEL_OK")
</pallas_src>

<mosaic_0001>
module attributes {stable_mosaic.version = 11 : i64} {
  func.func @_decoder_kernel(%arg0: i32, %arg1: memref<1x1x64xf32, #tpu.memory_space<vmem>>, %arg2: memref<16x3xf32, #tpu.memory_space<vmem>>, %arg3: memref<16x2xf32, #tpu.memory_space<vmem>>, %arg4: memref<16x1xf32, #tpu.memory_space<vmem>>, %arg5: memref<16x48xf32, #tpu.memory_space<vmem>>, %arg6: memref<16x1xf32, #tpu.memory_space<vmem>>, %arg7: memref<32x48xf32, #tpu.memory_space<vmem>>, %arg8: memref<32x1xf32, #tpu.memory_space<vmem>>, %arg9: memref<16x48xf32, #tpu.memory_space<vmem>>, %arg10: memref<16x1xf32, #tpu.memory_space<vmem>>, %arg11: memref<1x48xf32, #tpu.memory_space<vmem>>, %arg12: memref<1x1xf32, #tpu.memory_space<vmem>>, %arg13: memref<1x1x256xf32, #tpu.memory_space<vmem>>, %arg14: memref<1x66xf32, #tpu.memory_space<vmem>>, %arg15: memref<16x258xf32, #tpu.memory_space<vmem>>, %arg16: memref<48x256xf32, #tpu.memory_space<vmem>>) attributes {dimension_semantics = [#tpu.dimension_semantics<parallel>], iteration_bounds = array<i64: 2>, scalar_prefetch = 0 : i64, scratch_operands = 3 : i64, tpu.core_type = #tpu.core_type<tc>, window_params = [{transform_indices = @transform_0, window_bounds = array<i64: 1, 1, 64>}, {pipeline_mode = #tpu.pipeline_mode<synchronous>, transform_indices = @transform_1, window_bounds = array<i64: 16, 3>}, {pipeline_mode = #tpu.pipeline_mode<synchronous>, transform_indices = @transform_2, window_bounds = array<i64: 16, 2>}, {pipeline_mode = #tpu.pipeline_mode<synchronous>, transform_indices = @transform_3, window_bounds = array<i64: 16, 1>}, {pipeline_mode = #tpu.pipeline_mode<synchronous>, transform_indices = @transform_4, window_bounds = array<i64: 16, 48>}, {pipeline_mode = #tpu.pipeline_mode<synchronous>, transform_indices = @transform_5, window_bounds = array<i64: 16, 1>}, {pipeline_mode = #tpu.pipeline_mode<synchronous>, transform_indices = @transform_6, window_bounds = array<i64: 32, 48>}, {pipeline_mode = #tpu.pipeline_mode<synchronous>, transform_indices = @transform_7, window_bounds = array<i64: 32, 1>}, {pipeline_mode = #tpu.pipeline_mode<synchronous>, transform_indices = @transform_8, window_bounds = array<i64: 16, 48>}, {pipeline_mode = #tpu.pipeline_mode<synchronous>, transform_indices = @transform_9, window_bounds = array<i64: 16, 1>}, {pipeline_mode = #tpu.pipeline_mode<synchronous>, transform_indices = @transform_10, window_bounds = array<i64: 1, 48>}, {pipeline_mode = #tpu.pipeline_mode<synchronous>, transform_indices = @transform_11, window_bounds = array<i64: 1, 1>}, {transform_indices = @transform_12, window_bounds = array<i64: 1, 1, 256>}]} {
    %cst = arith.constant 0.000000e+00 : f32
    %0 = vector.broadcast %cst : f32 to vector<1x66xf32>
    %c0 = arith.constant 0 : index
    %c0_0 = arith.constant 0 : index
    %1 = vector.load %arg14[%c0, %c0_0] : memref<1x66xf32, #tpu.memory_space<vmem>>, vector<1x66xf32>
    tpu.vector_store %arg14[%c0, %c0_0], %0 {strides = array<i32>} : memref<1x66xf32, #tpu.memory_space<vmem>>, vector<1x66xf32>,
    %c0_1 = arith.constant 0 : index
    %c0_2 = arith.constant 0 : index
    %c0_3 = arith.constant 0 : index
    %2 = vector.load %arg1[%c0_1, %c0_2, %c0_3] : memref<1x1x64xf32, #tpu.memory_space<vmem>>, vector<1x1x64xf32>
    %3 = vector.shape_cast %2 : vector<1x1x64xf32> to vector<1x64xf32>
    %c0_4 = arith.constant 0 : index
    %c1 = arith.constant 1 : index
    %4 = vector.load %arg14[%c0_4, %c1] : memref<1x66xf32, #tpu.memory_space<vmem>>, vector<1x64xf32>
    tpu.vector_store %arg14[%c0_4, %c1], %3 {strides = array<i32>} : memref<1x66xf32, #tpu.memory_space<vmem>>, vector<1x64xf32>,
    %c0_5 = arith.constant 0 : index
    %c0_6 = arith.constant 0 : index
    %5 = vector.load %arg2[%c0_5, %c0_6] : memref<16x3xf32, #tpu.memory_space<vmem>>, vector<16x3xf32>
    %c0_7 = arith.constant 0 : index
    %c0_8 = arith.constant 0 : index
    %6 = vector.load %arg3[%c0_7, %c0_8] : memref<16x2xf32, #tpu.memory_space<vmem>>, vector<16x2xf32>
    %c0_9 = arith.constant 0 : index
    %c0_10 = arith.constant 0 : index
    %7 = vector.load %arg4[%c0_9, %c0_10] : memref<16x1xf32, #tpu.memory_space<vmem>>, vector<16x1xf32>
    %8 = vector.extract_strided_slice %5 {offsets = [0, 0], sizes = [16, 1], strides = [1, 1]} : vector<16x3xf32> to vector<16x1xf32>
    %c0_11 = arith.constant 0 : index
    %c0_12 = arith.constant 0 : index
    %9 = vector.load %arg14[%c0_11, %c0_12] : memref<1x66xf32, #tpu.memory_space<vmem>>, vector<1x64xf32>
    %10 = vector.broadcast %8 : vector<16x1xf32> to vector<16x64xf32>
    %11 = vector.broadcast %9 : vector<1x64xf32> to vector<16x64xf32>
    %12 = arith.mulf %10, %11 : vector<16x64xf32>
    %13 = vector.extract_strided_slice %5 {offsets = [0, 1], sizes = [16, 1], strides = [1, 1]} : vector<16x3xf32> to vector<16x1xf32>
    %c0_13 = arith.constant 0 : index
    %c1_14 = arith.constant 1 : index
    %14 = vector.load %arg14[%c0_13, %c1_14] : memref<1x66xf32, #tpu.memory_space<vmem>>, vector<1x64xf32>
    %15 = vector.broadcast %13 : vector<16x1xf32> to vector<16x64xf32>
    %16 = vector.broadcast %14 : vector<1x64xf32> to vector<16x64xf32>
    %17 = arith.mulf %15, %16 : vector<16x64xf32>
    %18 = arith.addf %12, %17 : vector<16x64xf32>
    %19 = vector.extract_strided_slice %5 {offsets = [0, 2], sizes = [16, 1], strides = [1, 1]} : vector<16x3xf32> to vector<16x1xf32>
    %c0_15 = arith.constant 0 : index
    %c2 = arith.constant 2 : index
    %20 = vector.load %arg14[%c0_15, %c2] : memref<1x66xf32, #tpu.memory_space<vmem>>, vector<1x64xf32>
    %21 = vector.broadcast %19 : vector<16x1xf32> to vector<16x64xf32>
    %22 = vector.broadcast %20 : vector<1x64xf32> to vector<16x64xf32>
    %23 = arith.mulf %21, %22 : vector<16x64xf32>
    %24 = arith.addf %18, %23 : vector<16x64xf32>
    %25 = vector.broadcast %7 : vector<16x1xf32> to vector<16x64xf32>
    %26 = arith.addf %24, %25 : vector<16x64xf32>
    %27 = vector.extract_strided_slice %6 {offsets = [0, 0], sizes = [16, 1], strides = [1, 1]} : vector<16x2xf32> to vector<16x1xf32>
    %c0_16 = arith.constant 0 : index
    %c1_17 = arith.constant 1 : index
    %28 = vector.load %arg14[%c0_16, %c1_17] : memref<1x66xf32, #tpu.memory_space<vmem>>, vector<1x64xf32>
    %29 = vector.broadcast %27 : vector<16x1xf32> to vector<16x64xf32>
    %30 = vector.broadcast %28 : vector<1x64xf32> to vector<16x64xf32>
    %31 = arith.mulf %29, %30 : vector<16x64xf32>
    %32 = vector.extract_strided_slice %6 {offsets = [0, 1], sizes = [16, 1], strides = [1, 1]} : vector<16x2xf32> to vector<16x1xf32>
    %c0_18 = arith.constant 0 : index
    %c2_19 = arith.constant 2 : index
    %33 = vector.load %arg14[%c0_18, %c2_19] : memref<1x66xf32, #tpu.memory_space<vmem>>, vector<1x64xf32>
    %34 = vector.broadcast %32 : vector<16x1xf32> to vector<16x64xf32>
    %35 = vector.broadcast %33 : vector<1x64xf32> to vector<16x64xf32>
    %36 = arith.mulf %34, %35 : vector<16x64xf32>
    %37 = arith.addf %31, %36 : vector<16x64xf32>
    %38 = vector.broadcast %7 : vector<16x1xf32> to vector<16x64xf32>
    %39 = arith.addf %37, %38 : vector<16x64xf32>
    %cst_20 = arith.constant 0.000000e+00 : f32
    %40 = vector.broadcast %cst_20 : f32 to vector<16x64xf32>
    %41 = arith.maximumf %26, %40 : vector<16x64xf32>
    %cst_21 = arith.constant 0.000000e+00 : f32
    %42 = vector.broadcast %cst_21 : f32 to vector<16x64xf32>
    %43 = arith.maximumf %39, %42 : vector<16x64xf32>
    %44 = tpu.iota {dimensions = array<i32: 0>} : vector<64x128xi32>
    %45 = tpu.iota {dimensions = array<i32: 1>} : vector<64x128xi32>
    %c2_i32 = arith.constant 2 : i32
    %46 = vector.broadcast %c2_i32 : i32 to vector<64x128xi32>
    %47 = arith.muli %46, %44 : vector<64x128xi32>
    %48 = arith.cmpi eq, %45, %47 : vector<64x128xi32>
    %49 = arith.extui %48 : vector<64x128xi1> to vector<64x128xi32>
    %50 = arith.sitofp %49 : vector<64x128xi32> to vector<64x128xf32>
    %c2_i32_22 = arith.constant 2 : i32
    %51 = vector.broadcast %c2_i32_22 : i32 to vector<64x128xi32>
    %52 = arith.muli %51, %44 : vector<64x128xi32>
    %c1_i32 = arith.constant 1 : i32
    %53 = vector.broadcast %c1_i32 : i32 to vector<64x128xi32>
    %54 = arith.addi %52, %53 : vector<64x128xi32>
    %55 = arith.cmpi eq, %45, %54 : vector<64x128xi32>
    %56 = arith.extui %55 : vector<64x128xi1> to vector<64x128xi32>
    %57 = arith.sitofp %56 : vector<64x128xi32> to vector<64x128xf32>
    %cst_23 = arith.constant dense<0.000000e+00> : vector<16x128xf32>
    %58 = tpu.matmul %41, %50, %cst_23 {dimension_numbers = #tpu.dot_dimension_numbers<[1], [0], [0], [1], [0, 0, 1, 1], [], []>} : vector<16x64xf32>, vector<64x128xf32>, vector<16x128xf32> -> vector<16x128xf32>
    %cst_24 = arith.constant dense<0.000000e+00> : vector<16x128xf32>
    %59 = tpu.matmul %43, %57, %cst_24 {dimension_numbers = #tpu.dot_dimension_numbers<[1], [0], [0], [1], [0, 0, 1, 1], [], []>} : vector<16x64xf32>, vector<64x128xf32>, vector<16x128xf32> -> vector<16x128xf32>
    %60 = arith.addf %58, %59 : vector<16x128xf32>
    %cst_25 = arith.constant 0.000000e+00 : f32
    %61 = vector.broadcast %cst_25 : f32 to vector<16x258xf32>
    %c0_26 = arith.constant 0 : index
    %c0_27 = arith.constant 0 : index
    %62 = vector.load %arg15[%c0_26, %c0_27] : memref<16x258xf32, #tpu.memory_space<vmem>>, vector<16x258xf32>
    tpu.vector_store %arg15[%c0_26, %c0_27], %61 {strides = array<i32>} : memref<16x258xf32, #tpu.memory_space<vmem>>, vector<16x258xf32>,
    %c0_28 = arith.constant 0 : index
    %c1_29 = arith.constant 1 : index
    %63 = vector.load %arg15[%c0_28, %c1_29] : memref<16x258xf32, #tpu.memory_space<vmem>>, vector<16x128xf32>
    tpu.vector_store %arg15[%c0_28, %c1_29], %60 {strides = array<i32>} : memref<16x258xf32, #tpu.memory_space<vmem>>, vector<16x128xf32>,
    %c0_30 = arith.constant 0 : index
    %c0_31 = arith.constant 0 : index
    %64 = vector.load %arg15[%c0_30, %c0_31] : memref<16x258xf32, #tpu.memory_space<vmem>>, vector<16x128xf32>
    %c0_32 = arith.constant 0 : index
    %c0_33 = arith.constant 0 : index
    %65 = vector.load %arg16[%c0_32, %c0_33] : memref<48x256xf32, #tpu.memory_space<vmem>>, vector<16x128xf32>
    tpu.vector_store %arg16[%c0_32, %c0_33], %64 {strides = array<i32>} : memref<48x256xf32, #tpu.memory_space<vmem>>, vector<16x128xf32>,
    %c0_34 = arith.constant 0 : index
    %c1_35 = arith.constant 1 : index
    %66 = vector.load %arg15[%c0_34, %c1_35] : memref<16x258xf32, #tpu.memory_space<vmem>>, vector<16x128xf32>
    %c16 = arith.constant 16 : index
    %c0_36 = arith.constant 0 : index
    %67 = vector.load %arg16[%c16, %c0_36] : memref<48x256xf32, #tpu.memory_space<vmem>>, vector<16x128xf32>
    tpu.vector_store %arg16[%c16, %c0_36], %66 {strides = array<i32>} : memref<48x256xf32, #tpu.memory_space<vmem>>, vector<16x128xf32>,
    %c0_37 = arith.constant 0 : index
    %c2_38 = arith.constant 2 : index
    %68 = vector.load %arg15[%c0_37, %c2_38] : memref<16x258xf32, #tpu.memory_space<vmem>>, vector<16x128xf32>
    %c32 = arith.constant 32 : index
    %c0_39 = arith.constant 0 : index
    %69 = vector.load %arg16[%c32, %c0_39] : memref<48x256xf32, #tpu.memory_space<vmem>>, vector<16x128xf32>
    tpu.vector_store %arg16[%c32, %c0_39], %68 {strides = array<i32>} : memref<48x256xf32, #tpu.memory_space<vmem>>, vector<16x128xf32>,
    %c0_40 = arith.constant 0 : index
    %c0_41 = arith.constant 0 : index
    %70 = vector.load %arg5[%c0_40, %c0_41] : memref<16x48xf32, #tpu.memory_space<vmem>>, vector<16x48xf32>
    %c0_42 = arith.constant 0 : index
    %c0_43 = arith.constant 0 : index
    %71 = vector.load %arg16[%c0_42, %c0_43] : memref<48x256xf32, #tpu.memory_space<vmem>>, vector<48x128xf32>
    %cst_44 = arith.constant dense<0.000000e+00> : vector<16x128xf32>
    %72 = tpu.matmul %70, %71, %cst_44 {dimension_numbers = #tpu.dot_dimension_numbers<[1], [0], [0], [1], [0, 0, 1, 1], [], []>} : vector<16x48xf32>, vector<48x128xf32>, vector<16x128xf32> -> vector<16x128xf32>
    %c0_45 = arith.constant 0 : index
    %c0_46 = arith.constant 0 : index
    %73 = vector.load %arg6[%c0_45, %c0_46] : memref<16x1xf32, #tpu.memory_space<vmem>>, vector<16x1xf32>
    %74 = vector.broadcast %73 : vector<16x1xf32> to vector<16x128xf32>
    %75 = arith.addf %72, %74 : vector<16x128xf32>
    %c0_47 = arith.constant 0 : index
    %c1_48 = arith.constant 1 : index
    %76 = vector.load %arg15[%c0_47, %c1_48] : memref<16x258xf32, #tpu.memory_space<vmem>>, vector<16x128xf32>
    tpu.vector_store %arg15[%c0_47, %c1_48], %75 {strides = array<i32>} : memref<16x258xf32, #tpu.memory_space<vmem>>, vector<16x128xf32>,
    %c0_49 = arith.constant 0 : index
    %c0_50 = arith.constant 0 : index
    %77 = vector.load %arg15[%c0_49, %c0_50] : memref<16x258xf32, #tpu.memory_space<vmem>>, vector<16x128xf32>
    %c0_51 = arith.constant 0 : index
    %c0_52 = arith.constant 0 : index
    %78 = vector.load %arg16[%c0_51, %c0_52] : memref<48x256xf32, #tpu.memory_space<vmem>>, vector<16x128xf32>
    tpu.vector_store %arg16[%c0_51, %c0_52], %77 {strides = array<i32>} : memref<48x256xf32, #tpu.memory_space<vmem>>, vector<16x128xf32>,
    %c0_53 = arith.constant 0 : index
    %c1_54 = arith.constant 1 : index
    %79 = vector.load %arg15[%c0_53, %c1_54] : memref<16x258xf32, #tpu.memory_space<vmem>>, vector<16x128xf32>
    %c16_55 = arith.constant 16 : index
    %c0_56 = arith.constant 0 : index
    %80 = vector.load %arg16[%c16_55, %c0_56] : memref<48x256xf32, #tpu.memory_space<vmem>>, vector<16x128xf32>
    tpu.vector_store %arg16[%c16_55, %c0_56], %79 {strides = array<i32>} : memref<48x256xf32, #tpu.memory_space<vmem>>, vector<16x128xf32>,
    %c0_57 = arith.constant 0 : index
    %c2_58 = arith.constant 2 : index
    %81 = vector.load %arg15[%c0_57, %c2_58] : memref<16x258xf32, #tpu.memory_space<vmem>>, vector<16x128xf32>
    %c32_59 = arith.constant 32 : index
    %c0_60 = arith.constant 0 : index
    %82 = vector.load %arg16[%c32_59, %c0_60] : memref<48x256xf32, #tpu.memory_space<vmem>>, vector<16x128xf32>
    tpu.vector_store %arg16[%c32_59, %c0_60], %81 {strides = array<i32>} : memref<48x256xf32, #tpu.memory_space<vmem>>, vector<16x128xf32>,
    %c0_61 = arith.constant 0 : index
    %c0_62 = arith.constant 0 : index
    %83 = vector.load %arg7[%c0_61, %c0_62] : memref<32x48xf32, #tpu.memory_space<vmem>>, vector<32x48xf32>
    %c0_63 = arith.constant 0 : index
    %c0_64 = arith.constant 0 : index
    %84 = vector.load %arg16[%c0_63, %c0_64] : memref<48x256xf32, #tpu.memory_space<vmem>>, vector<48x128xf32>
    %cst_65 = arith.constant dense<0.000000e+00> : vector<32x128xf32>
    %85 = tpu.matmul %83, %84, %cst_65 {dimension_numbers = #tpu.dot_dimension_numbers<[1], [0], [0], [1], [0, 0, 1, 1], [], []>} : vector<32x48xf32>, vector<48x128xf32>, vector<32x128xf32> -> vector<32x128xf32>
    %c0_66 = arith.constant 0 : index
    %c0_67 = arith.constant 0 : index
    %86 = vector.load %arg8[%c0_66, %c0_67] : memref<32x1xf32, #tpu.memory_space<vmem>>, vector<32x1xf32>
    %87 = vector.broadcast %86 : vector<32x1xf32> to vector<32x128xf32>
    %88 = arith.addf %85, %87 : vector<32x128xf32>
    %cst_68 = arith.constant 0.000000e+00 : f32
    %89 = vector.broadcast %cst_68 : f32 to vector<32x128xf32>
    %90 = arith.maximumf %88, %89 : vector<32x128xf32>
    %91 = vector.extract_strided_slice %90 {offsets = [0, 0], sizes = [16, 128], strides = [1, 1]} : vector<32x128xf32> to vector<16x128xf32>
    %92 = vector.extract_strided_slice %90 {offsets = [16, 0], sizes = [16, 128], strides = [1, 1]} : vector<32x128xf32> to vector<16x128xf32>
    %93 = tpu.iota {dimensions = array<i32: 0>} : vector<128x256xi32>
    %94 = tpu.iota {dimensions = array<i32: 1>} : vector<128x256xi32>
    %c2_i32_69 = arith.constant 2 : i32
    %95 = vector.broadcast %c2_i32_69 : i32 to vector<128x256xi32>
    %96 = arith.muli %95, %93 : vector<128x256xi32>
    %97 = arith.cmpi eq, %94, %96 : vector<128x256xi32>
    %98 = arith.extui %97 : vector<128x256xi1> to vector<128x256xi32>
    %99 = arith.sitofp %98 : vector<128x256xi32> to vector<128x256xf32>
    %c2_i32_70 = arith.constant 2 : i32
    %100 = vector.broadcast %c2_i32_70 : i32 to vector<128x256xi32>
    %101 = arith.muli %100, %93 : vector<128x256xi32>
    %c1_i32_71 = arith.constant 1 : i32
    %102 = vector.broadcast %c1_i32_71 : i32 to vector<128x256xi32>
    %103 = arith.addi %101, %102 : vector<128x256xi32>
    %104 = arith.cmpi eq, %94, %103 : vector<128x256xi32>
    %105 = arith.extui %104 : vector<128x256xi1> to vector<128x256xi32>
    %106 = arith.sitofp %105 : vector<128x256xi32> to vector<128x256xf32>
    %cst_72 = arith.constant dense<0.000000e+00> : vector<16x256xf32>
    %107 = tpu.matmul %91, %99, %cst_72 {dimension_numbers = #tpu.dot_dimension_numbers<[1], [0], [0], [1], [0, 0, 1, 1], [], []>} : vector<16x128xf32>, vector<128x256xf32>, vector<16x256xf32> -> vector<16x256xf32>
    %cst_73 = arith.constant dense<0.000000e+00> : vector<16x256xf32>
    %108 = tpu.matmul %92, %106, %cst_73 {dimension_numbers = #tpu.dot_dimension_numbers<[1], [0], [0], [1], [0, 0, 1, 1], [], []>} : vector<16x128xf32>, vector<128x256xf32>, vector<16x256xf32> -> vector<16x256xf32>
    %109 = arith.addf %107, %108 : vector<16x256xf32>
    %c0_74 = arith.constant 0 : index
    %c1_75 = arith.constant 1 : index
    %110 = vector.load %arg15[%c0_74, %c1_75] : memref<16x258xf32, #tpu.memory_space<vmem>>, vector<16x256xf32>
    tpu.vector_store %arg15[%c0_74, %c1_75], %109 {strides = array<i32>} : memref<16x258xf32, #tpu.memory_space<vmem>>, vector<16x256xf32>,
    %c0_76 = arith.constant 0 : index
    %c0_77 = arith.constant 0 : index
    %111 = vector.load %arg15[%c0_76, %c0_77] : memref<16x258xf32, #tpu.memory_space<vmem>>, vector<16x256xf32>
    %c0_78 = arith.constant 0 : index
    %c0_79 = arith.constant 0 : index
    %112 = vector.load %arg16[%c0_78, %c0_79] : memref<48x256xf32, #tpu.memory_space<vmem>>, vector<16x256xf32>
    tpu.vector_store %arg16[%c0_78, %c0_79], %111 {strides = array<i32>} : memref<48x256xf32, #tpu.memory_space<vmem>>, vector<16x256xf32>,
    %c0_80 = arith.constant 0 : index
    %c1_81 = arith.constant 1 : index
    %113 = vector.load %arg15[%c0_80, %c1_81] : memref<16x258xf32, #tpu.memory_space<vmem>>, vector<16x256xf32>
    %c16_82 = arith.constant 16 : index
    %c0_83 = arith.constant 0 : index
    %114 = vector.load %arg16[%c16_82, %c0_83] : memref<48x256xf32, #tpu.memory_space<vmem>>, vector<16x256xf32>
    tpu.vector_store %arg16[%c16_82, %c0_83], %113 {strides = array<i32>} : memref<48x256xf32, #tpu.memory_space<vmem>>, vector<16x256xf32>,
    %c0_84 = arith.constant 0 : index
    %c2_85 = arith.constant 2 : index
    %115 = vector.load %arg15[%c0_84, %c2_85] : memref<16x258xf32, #tpu.memory_space<vmem>>, vector<16x256xf32>
    %c32_86 = arith.constant 32 : index
    %c0_87 = arith.constant 0 : index
    %116 = vector.load %arg16[%c32_86, %c0_87] : memref<48x256xf32, #tpu.memory_space<vmem>>, vector<16x256xf32>
    tpu.vector_store %arg16[%c32_86, %c0_87], %115 {strides = array<i32>} : memref<48x256xf32, #tpu.memory_space<vmem>>, vector<16x256xf32>,
    %c0_88 = arith.constant 0 : index
    %c0_89 = arith.constant 0 : index
    %117 = vector.load %arg9[%c0_88, %c0_89] : memref<16x48xf32, #tpu.memory_space<vmem>>, vector<16x48xf32>
    %c0_90 = arith.constant 0 : index
    %c0_91 = arith.constant 0 : index
    %118 = vector.load %arg16[%c0_90, %c0_91] : memref<48x256xf32, #tpu.memory_space<vmem>>, vector<48x256xf32>
    %cst_92 = arith.constant dense<0.000000e+00> : vector<16x256xf32>
    %119 = tpu.matmul %117, %118, %cst_92 {dimension_numbers = #tpu.dot_dimension_numbers<[1], [0], [0], [1], [0, 0, 1, 1], [], []>} : vector<16x48xf32>, vector<48x256xf32>, vector<16x256xf32> -> vector<16x256xf32>
    %c0_93 = arith.constant 0 : index
    %c0_94 = arith.constant 0 : index
    %120 = vector.load %arg10[%c0_93, %c0_94] : memref<16x1xf32, #tpu.memory_space<vmem>>, vector<16x1xf32>
    %121 = vector.broadcast %120 : vector<16x1xf32> to vector<16x256xf32>
    %122 = arith.addf %119, %121 : vector<16x256xf32>
    %c0_95 = arith.constant 0 : index
    %c1_96 = arith.constant 1 : index
    %123 = vector.load %arg15[%c0_95, %c1_96] : memref<16x258xf32, #tpu.memory_space<vmem>>, vector<16x256xf32>
    tpu.vector_store %arg15[%c0_95, %c1_96], %122 {strides = array<i32>} : memref<16x258xf32, #tpu.memory_space<vmem>>, vector<16x256xf32>,
    %c0_97 = arith.constant 0 : index
    %c0_98 = arith.constant 0 : index
    %124 = vector.load %arg15[%c0_97, %c0_98] : memref<16x258xf32, #tpu.memory_space<vmem>>, vector<16x256xf32>
    %c0_99 = arith.constant 0 : index
    %c0_100 = arith.constant 0 : index
    %125 = vector.load %arg16[%c0_99, %c0_100] : memref<48x256xf32, #tpu.memory_space<vmem>>, vector<16x256xf32>
    tpu.vector_store %arg16[%c0_99, %c0_100], %124 {strides = array<i32>} : memref<48x256xf32, #tpu.memory_space<vmem>>, vector<16x256xf32>,
    %c0_101 = arith.constant 0 : index
    %c1_102 = arith.constant 1 : index
    %126 = vector.load %arg15[%c0_101, %c1_102] : memref<16x258xf32, #tpu.memory_space<vmem>>, vector<16x256xf32>
    %c16_103 = arith.constant 16 : index
    %c0_104 = arith.constant 0 : index
    %127 = vector.load %arg16[%c16_103, %c0_104] : memref<48x256xf32, #tpu.memory_space<vmem>>, vector<16x256xf32>
    tpu.vector_store %arg16[%c16_103, %c0_104], %126 {strides = array<i32>} : memref<48x256xf32, #tpu.memory_space<vmem>>, vector<16x256xf32>,
    %c0_105 = arith.constant 0 : index
    %c2_106 = arith.constant 2 : index
    %128 = vector.load %arg15[%c0_105, %c2_106] : memref<16x258xf32, #tpu.memory_space<vmem>>, vector<16x256xf32>
    %c32_107 = arith.constant 32 : index
    %c0_108 = arith.constant 0 : index
    %129 = vector.load %arg16[%c32_107, %c0_108] : memref<48x256xf32, #tpu.memory_space<vmem>>, vector<16x256xf32>
    tpu.vector_store %arg16[%c32_107, %c0_108], %128 {strides = array<i32>} : memref<48x256xf32, #tpu.memory_space<vmem>>, vector<16x256xf32>,
    %c0_109 = arith.constant 0 : index
    %c0_110 = arith.constant 0 : index
    %130 = vector.load %arg11[%c0_109, %c0_110] : memref<1x48xf32, #tpu.memory_space<vmem>>, vector<1x48xf32>
    %c0_111 = arith.constant 0 : index
    %c0_112 = arith.constant 0 : index
    %131 = vector.load %arg16[%c0_111, %c0_112] : memref<48x256xf32, #tpu.memory_space<vmem>>, vector<48x256xf32>
    %cst_113 = arith.constant dense<0.000000e+00> : vector<1x256xf32>
    %132 = tpu.matmul %130, %131, %cst_113 {dimension_numbers = #tpu.dot_dimension_numbers<[1], [0], [0], [1], [0, 0, 1, 1], [], []>} : vector<1x48xf32>, vector<48x256xf32>, vector<1x256xf32> -> vector<1x256xf32>
    %c0_114 = arith.constant 0 : index
    %c0_115 = arith.constant 0 : index
    %133 = vector.load %arg12[%c0_114, %c0_115] : memref<1x1xf32, #tpu.memory_space<vmem>>, vector<1x1xf32>
    %134 = vector.broadcast %133 : vector<1x1xf32> to vector<1x256xf32>
    %135 = arith.addf %132, %134 : vector<1x256xf32>
    %c0_116 = arith.constant 0 : index
    %c0_117 = arith.constant 0 : index
    %c0_118 = arith.constant 0 : index
    %136 = vector.load %arg13[%c0_116, %c0_117, %c0_118] : memref<1x1x256xf32, #tpu.memory_space<vmem>>, vector<1x1x256xf32>
    %137 = vector.shape_cast %136 : vector<1x1x256xf32> to vector<1x256xf32>
    %138 = vector.shape_cast %135 : vector<1x256xf32> to vector<1x1x256xf32>
    tpu.vector_store %arg13[%c0_116, %c0_117, %c0_118], %138 {strides = array<i32>} : memref<1x1x256xf32, #tpu.memory_space<vmem>>, vector<1x1x256xf32>,
    return
  }
  func.func @transform_0(%arg0: i32) -> (i32, i32, i32) {
    %c0_i32 = arith.constant 0 : i32
    %c0_i32_0 = arith.constant 0 : i32
    %c0_i32_1 = arith.constant 0 : i32
    return %arg0, %c0_i32, %c0_i32_0 : i32, i32, i32
  }
  func.func @transform_1(%arg0: i32) -> (i32, i32) {
    %c0_i32 = arith.constant 0 : i32
    %c0_i32_0 = arith.constant 0 : i32
    %c0_i32_1 = arith.constant 0 : i32
    return %c0_i32, %c0_i32_0 : i32, i32
  }
  func.func @transform_2(%arg0: i32) -> (i32, i32) {
    %c0_i32 = arith.constant 0 : i32
    %c0_i32_0 = arith.constant 0 : i32
    %c0_i32_1 = arith.constant 0 : i32
    return %c0_i32, %c0_i32_0 : i32, i32
  }
  func.func @transform_3(%arg0: i32) -> (i32, i32) {
    %c0_i32 = arith.constant 0 : i32
    %c0_i32_0 = arith.constant 0 : i32
    %c0_i32_1 = arith.constant 0 : i32
    return %c0_i32, %c0_i32_0 : i32, i32
  }
  func.func @transform_4(%arg0: i32) -> (i32, i32) {
    %c0_i32 = arith.constant 0 : i32
    %c0_i32_0 = arith.constant 0 : i32
    %c0_i32_1 = arith.constant 0 : i32
    return %c0_i32, %c0_i32_0 : i32, i32
  }
  func.func @transform_5(%arg0: i32) -> (i32, i32) {
    %c0_i32 = arith.constant 0 : i32
    %c0_i32_0 = arith.constant 0 : i32
    %c0_i32_1 = arith.constant 0 : i32
    return %c0_i32, %c0_i32_0 : i32, i32
  }
  func.func @transform_6(%arg0: i32) -> (i32, i32) {
    %c0_i32 = arith.constant 0 : i32
    %c0_i32_0 = arith.constant 0 : i32
    %c0_i32_1 = arith.constant 0 : i32
    return %c0_i32, %c0_i32_0 : i32, i32
  }
  func.func @transform_7(%arg0: i32) -> (i32, i32) {
    %c0_i32 = arith.constant 0 : i32
    %c0_i32_0 = arith.constant 0 : i32
    %c0_i32_1 = arith.constant 0 : i32
    return %c0_i32, %c0_i32_0 : i32, i32
  }
  func.func @transform_8(%arg0: i32) -> (i32, i32) {
    %c0_i32 = arith.constant 0 : i32
    %c0_i32_0 = arith.constant 0 : i32
    %c0_i32_1 = arith.constant 0 : i32
    return %c0_i32, %c0_i32_0 : i32, i32
  }
  func.func @transform_9(%arg0: i32) -> (i32, i32) {
    %c0_i32 = arith.constant 0 : i32
    %c0_i32_0 = arith.constant 0 : i32
    %c0_i32_1 = arith.constant 0 : i32
    return %c0_i32, %c0_i32_0 : i32, i32
  }
  func.func @transform_10(%arg0: i32) -> (i32, i32) {
    %c0_i32 = arith.constant 0 : i32
    %c0_i32_0 = arith.constant 0 : i32
    %c0_i32_1 = arith.constant 0 : i32
    return %c0_i32, %c0_i32_0 : i32, i32
  }
  func.func @transform_11(%arg0: i32) -> (i32, i32) {
    %c0_i32 = arith.constant 0 : i32
    %c0_i32_0 = arith.constant 0 : i32
    %c0_i32_1 = arith.constant 0 : i32
    return %c0_i32, %c0_i32_0 : i32, i32
  }
  func.func @transform_12(%arg0: i32) -> (i32, i32, i32) {
    %c0_i32 = arith.constant 0 : i32
    %c0_i32_0 = arith.constant 0 : i32
    %c0_i32_1 = arith.constant 0 : i32
    return %arg0, %c0_i32, %c0_i32_0 : i32, i32, i32
  }
}

</mosaic_0001>

<llo_original>
// kernel: my_decoder_forward.1
$region0: #{my_decoder_forward.1}
  #allocation0 [shape = 'u32[]', space=smem, size = 0x4, offset = 0x4, fixed_abs, tag = 'smem constant byte address 0x4 - core index']
  #allocation1 [shape = 'u32[144,128]{1,0:T(1,128)}', space=vmem, size = 0x12000, scoped, tag = 'internal scratch']
  #allocation2 [shape = 'f32[1,66]{1,0:T(1,128)}', space=vmem, size = 0x200, scoped, tag = 'scratch operand']
  #allocation3 [shape = 'f32[16,258]{1,0:T(8,128)}', space=vmem, size = 0x6000, scoped, tag = 'scratch operand']
  #allocation4 [shape = 'f32[48,256]{1,0:T(8,128)}', space=vmem, size = 0xc000, scoped, tag = 'scratch operand']
  #allocation5 [shape = 'f32[1,1]{1,0:T(1,128)S(1)}', space=vmem, size = 0x200, scoped, tag = 'scoped memory for my_decoder_forward.1']
  %s0 = inlined_call_operand.vmem [shape: f32[2,1,64], index: 0, kind: input, shape index: {}]
  %s1 = inlined_call_operand.vmem [shape: f32[16,3], index: 1, kind: input, shape index: {}]
  %s2 = inlined_call_operand.vmem [shape: f32[16,2], index: 2, kind: input, shape index: {}]
  %s3 = inlined_call_operand.vmem [shape: f32[16,1], index: 3, kind: input, shape index: {}]
  %s4 = inlined_call_operand.vmem [shape: f32[16,48], index: 4, kind: input, shape index: {}]
  %s5 = inlined_call_operand.vmem [shape: f32[16,1], index: 5, kind: input, shape index: {}]
  %s6 = inlined_call_operand.vmem [shape: f32[32,48], index: 6, kind: input, shape index: {}]
  %s7 = inlined_call_operand.vmem [shape: f32[32,1], index: 7, kind: input, shape index: {}]
  %s8 = inlined_call_operand.vmem [shape: f32[16,48], index: 8, kind: input, shape index: {}]
  %s9 = inlined_call_operand.vmem [shape: f32[16,1], index: 9, kind: input, shape index: {}]
  %s10 = inlined_call_operand.vmem [shape: f32[1,48], index: 10, kind: input, shape index: {}]
  %s11 = inlined_call_operand.<no memory space> [shape: f32[1,1], index: 11, kind: input, shape index: {}]
  %s12 = inlined_call_operand.hbm [shape: f32[2,1,256], index: 12, kind: output, shape index: {}]
  %s13 = sld [smem:[#allocation0]]
  $region81: #{my_decoder_forward.1} parent=0
    _
  %s15 = ssub.s32 1, %s13
  %s16 = scalar_select 0, %s15, %s13
  %v17 = vstv %s11
  %18 = vst [vmem:[#allocation5] sm:$0x1] %v17
  $region1: #{my_decoder_forward.1} parent=0
    #allocation6 [shape = 'u8[2048]{0}', space=vmem, size = 0x800, scoped, tag = 'output window, operand 0']
    #allocation7 [shape = 's32[2]{0}', space=sflag, size = 0x8, scoped, tag = 'scoped memory for my_decoder_forward.1']
    %19 = vsyncpa [#allocation7], 0
    %s20 = scalar_lea.sflag [#allocation7], 1
    %21 = vsyncpa %s20, 0
    loop: start=0, step=1, limit=4
    $region2: #{my_decoder_forward.1} parent=1 // loop_pre_header
      _
    $region3: #{my_decoder_forward.1} parent=1 // loop_header
      %s23 = sphi 0, %s27
      %p24 = scmp.ge.s32.totalorder %s23, 4
      %s33 = sphi 0, %s35
      %s36 = sphi 0, %s33
      %s37 = sphi 0, %s36
      %s53 = sphi 0, %s37
      %s57 = sphi 0, %s57
      %s59 = sphi 0, %s57
      %s60 = sphi 0, %s59
      %s74 = sphi 0, %s60
      %s78 = sphi 0, %s78
      %s80 = sphi 0, %s78
      %s81 = sphi 0, %s80
      %s95 = sphi 0, %s81
      %s99 = sphi 0, %s99
      %s101 = sphi 0, %s99
      %s102 = sphi 0, %s101
      %s116 = sphi 0, %s102
      %s120 = sphi 0, %s120
      %s122 = sphi 0, %s120
      %s123 = sphi 0, %s122
      %s137 = sphi 0, %s123
      %s141 = sphi 0, %s141
      %s143 = sphi 0, %s141
      %s144 = sphi 0, %s143
      %s158 = sphi 0, %s144
      %s162 = sphi 0, %s162
      %s164 = sphi 0, %s162
      %s165 = sphi 0, %s164
      %s179 = sphi 0, %s165
      %s183 = sphi 0, %s183
      %s185 = sphi 0, %s183
      %s186 = sphi 0, %s185
      %s200 = sphi 0, %s186
      %s204 = sphi 0, %s204
      %s206 = sphi 0, %s204
      %s207 = sphi 0, %s206
      %s221 = sphi 0, %s207
      %s225 = sphi 0, %s225
      %s227 = sphi 0, %s225
      %s228 = sphi 0, %s227
      %s242 = sphi 0, %s228
      %s246 = sphi 0, %s246
      %s248 = sphi 0, %s246
      %s249 = sphi 0, %s248
      %s263 = sphi 0, %s249
      %s267 = sphi 0, %s267
      %s269 = sphi 0, %s267
      %s270 = sphi 0, %s269
      %s284 = sphi 0, %s270
      %s290 = sphi 0, %s292
      %s293 = sphi 0, %s290
      %s294 = sphi 0, %s293
      %s310 = sphi 0, %s294
    $region4: #{my_decoder_forward.1} parent=1 // loop_header_branch
      %26 = sbr.rel (%p24) target = $region8
    $region5: #{my_decoder_forward.1} parent=1 // loop_body
      %s28 = ssub.s32 %s23, 1
      %s29 = ssub.s32 %s23, 2
      %s30 = sadd.s32 %s23, 1
      %s31 = ssub.s32 %s23, %s30
      %p32 = scmp.eq.s32.totalorder %s31, 0
      %s34 = sadd.s32 %s33, 1
      %s35 = scalar_select %p32, %s33, %s34
      %p38 = pneg %p32
      %p39 = scmp.eq.s32.totalorder %s23, 1
      %p40 = por %p38, %p39
      %p41 = scmp.ne.s32.totalorder %s33, %s36
      %p42 = scmp.eq.s32.totalorder %s23, 0
      %p43 = por %p41, %p42
      %p44 = scmp.ne.s32.totalorder %s33, %s36
      %p45 = scmp.eq.s32.totalorder %s28, 1
      %p46 = por %p44, %p45
      %p47 = scmp.ne.s32.totalorder %s36, %s37
      %p48 = scmp.eq.s32.totalorder %s28, 0
      %p49 = por %p47, %p48
      %p50 = scmp.ne.s32.totalorder %s36, %s37
      %p51 = scmp.eq.s32.totalorder %s29, 1
      %p52 = por %p50, %p51
      %p54 = scmp.ne.s32.totalorder %s37, %s53
      %p55 = scmp.eq.s32.totalorder %s29, 0
      %p56 = por %p54, %p55
      %s58 = sadd.s32 %s57, 1
      %p61 = scmp.eq.s32.totalorder %s23, 1
      %p62 = scmp.ne.s32.totalorder %s57, %s59
      %p63 = scmp.eq.s32.totalorder %s23, 0
      %p64 = por %p62, %p63
      %p65 = scmp.ne.s32.totalorder %s57, %s59
      %p66 = scmp.eq.s32.totalorder %s28, 1
      %p67 = por %p65, %p66
      %p68 = scmp.ne.s32.totalorder %s59, %s60
      %p69 = scmp.eq.s32.totalorder %s28, 0
      %p70 = por %p68, %p69
      %p71 = scmp.ne.s32.totalorder %s59, %s60
      %p72 = scmp.eq.s32.totalorder %s29, 1
      %p73 = por %p71, %p72
      %p75 = scmp.ne.s32.totalorder %s60, %s74
      %p76 = scmp.eq.s32.totalorder %s29, 0
      %p77 = por %p75, %p76
      %s79 = sadd.s32 %s78, 1
      %p82 = scmp.eq.s32.totalorder %s23, 1
      %p83 = scmp.ne.s32.totalorder %s78, %s80
      %p84 = scmp.eq.s32.totalorder %s23, 0
      %p85 = por %p83, %p84
      %p86 = scmp.ne.s32.totalorder %s78, %s80
      %p87 = scmp.eq.s32.totalorder %s28, 1
      %p88 = por %p86, %p87
      %p89 = scmp.ne.s32.totalorder %s80, %s81
      %p90 = scmp.eq.s32.totalorder %s28, 0
      %p91 = por %p89, %p90
      %p92 = scmp.ne.s32.totalorder %s80, %s81
      %p93 = scmp.eq.s32.totalorder %s29, 1
      %p94 = por %p92, %p93
      %p96 = scmp.ne.s32.totalorder %s81, %s95
      %p97 = scmp.eq.s32.totalorder %s29, 0
      %p98 = por %p96, %p97
      %s100 = sadd.s32 %s99, 1
      %p103 = scmp.eq.s32.totalorder %s23, 1
      %p104 = scmp.ne.s32.totalorder %s99, %s101
      %p105 = scmp.eq.s32.totalorder %s23, 0
      %p106 = por %p104, %p105
      %p107 = scmp.ne.s32.totalorder %s99, %s101
      %p108 = scmp.eq.s32.totalorder %s28, 1
      %p109 = por %p107, %p108
      %p110 = scmp.ne.s32.totalorder %s101, %s102
      %p111 = scmp.eq.s32.totalorder %s28, 0
      %p112 = por %p110, %p111
      %p113 = scmp.ne.s32.totalorder %s101, %s102
      %p114 = scmp.eq.s32.totalorder %s29, 1
      %p115 = por %p113, %p114
      %p117 = scmp.ne.s32.totalorder %s102, %s116
      %p118 = scmp.eq.s32.totalorder %s29, 0
      %p119 = por %p117, %p118
      %s121 = sadd.s32 %s120, 1
      %p124 = scmp.eq.s32.totalorder %s23, 1
      %p125 = scmp.ne.s32.totalorder %s120, %s122
      %p126 = scmp.eq.s32.totalorder %s23, 0
      %p127 = por %p125, %p126
      %p128 = scmp.ne.s32.totalorder %s120, %s122
      %p129 = scmp.eq.s32.totalorder %s28, 1
      %p130 = por %p128, %p129
      %p131 = scmp.ne.s32.totalorder %s122, %s123
      %p132 = scmp.eq.s32.totalorder %s28, 0
      %p133 = por %p131, %p132
      %p134 = scmp.ne.s32.totalorder %s122, %s123
      %p135 = scmp.eq.s32.totalorder %s29, 1
      %p136 = por %p134, %p135
      %p138 = scmp.ne.s32.totalorder %s123, %s137
      %p139 = scmp.eq.s32.totalorder %s29, 0
      %p140 = por %p138, %p139
      %s142 = sadd.s32 %s141, 1
      %p145 = scmp.eq.s32.totalorder %s23, 1
      %p146 = scmp.ne.s32.totalorder %s141, %s143
      %p147 = scmp.eq.s32.totalorder %s23, 0
      %p148 = por %p146, %p147
      %p149 = scmp.ne.s32.totalorder %s141, %s143
      %p150 = scmp.eq.s32.totalorder %s28, 1
      %p151 = por %p149, %p150
      %p152 = scmp.ne.s32.totalorder %s143, %s144
      %p153 = scmp.eq.s32.totalorder %s28, 0
      %p154 = por %p152, %p153
      %p155 = scmp.ne.s32.totalorder %s143, %s144
      %p156 = scmp.eq.s32.totalorder %s29, 1
      %p157 = por %p155, %p156
      %p159 = scmp.ne.s32.totalorder %s144, %s158
      %p160 = scmp.eq.s32.totalorder %s29, 0
      %p161 = por %p159, %p160
      %s163 = sadd.s32 %s162, 1
      %p166 = scmp.eq.s32.totalorder %s23, 1
      %p167 = scmp.ne.s32.totalorder %s162, %s164
      %p168 = scmp.eq.s32.totalorder %s23, 0
      %p169 = por %p167, %p168
      %p170 = scmp.ne.s32.totalorder %s162, %s164
      %p171 = scmp.eq.s32.totalorder %s28, 1
      %p172 = por %p170, %p171
      %p173 = scmp.ne.s32.totalorder %s164, %s165
      %p174 = scmp.eq.s32.totalorder %s28, 0
      %p175 = por %p173, %p174
      %p176 = scmp.ne.s32.totalorder %s164, %s165
      %p177 = scmp.eq.s32.totalorder %s29, 1
      %p178 = por %p176, %p177
      %p180 = scmp.ne.s32.totalorder %s165, %s179
      %p181 = scmp.eq.s32.totalorder %s29, 0
      %p182 = por %p180, %p181
      %s184 = sadd.s32 %s183, 1
      %p187 = scmp.eq.s32.totalorder %s23, 1
      %p188 = scmp.ne.s32.totalorder %s183, %s185
      %p189 = scmp.eq.s32.totalorder %s23, 0
      %p190 = por %p188, %p189
      %p191 = scmp.ne.s32.totalorder %s183, %s185
      %p192 = scmp.eq.s32.totalorder %s28, 1
      %p193 = por %p191, %p192
      %p194 = scmp.ne.s32.totalorder %s185, %s186
      %p195 = scmp.eq.s32.totalorder %s28, 0
      %p196 = por %p194, %p195
      %p197 = scmp.ne.s32.totalorder %s185, %s186
      %p198 = scmp.eq.s32.totalorder %s29, 1
      %p199 = por %p197, %p198
      %p201 = scmp.ne.s32.totalorder %s186, %s200
      %p202 = scmp.eq.s32.totalorder %s29, 0
      %p203 = por %p201, %p202
      %s205 = sadd.s32 %s204, 1
      %p208 = scmp.eq.s32.totalorder %s23, 1
      %p209 = scmp.ne.s32.totalorder %s204, %s206
      %p210 = scmp.eq.s32.totalorder %s23, 0
      %p211 = por %p209, %p210
      %p212 = scmp.ne.s32.totalorder %s204, %s206
      %p213 = scmp.eq.s32.totalorder %s28, 1
      %p214 = por %p212, %p213
      %p215 = scmp.ne.s32.totalorder %s206, %s207
      %p216 = scmp.eq.s32.totalorder %s28, 0
      %p217 = por %p215, %p216
      %p218 = scmp.ne.s32.totalorder %s206, %s207
      %p219 = scmp.eq.s32.totalorder %s29, 1
      %p220 = por %p218, %p219
      %p222 = scmp.ne.s32.totalorder %s207, %s221
      %p223 = scmp.eq.s32.totalorder %s29, 0
      %p224 = por %p222, %p223
      %s226 = sadd.s32 %s225, 1
      %p229 = scmp.eq.s32.totalorder %s23, 1
      %p230 = scmp.ne.s32.totalorder %s225, %s227
      %p231 = scmp.eq.s32.totalorder %s23, 0
      %p232 = por %p230, %p231
      %p233 = scmp.ne.s32.totalorder %s225, %s227
      %p234 = scmp.eq.s32.totalorder %s28, 1
      %p235 = por %p233, %p234
      %p236 = scmp.ne.s32.totalorder %s227, %s228
      %p237 = scmp.eq.s32.totalorder %s28, 0
      %p238 = por %p236, %p237
      %p239 = scmp.ne.s32.totalorder %s227, %s228
      %p240 = scmp.eq.s32.totalorder %s29, 1
      %p241 = por %p239, %p240
      %p243 = scmp.ne.s32.totalorder %s228, %s242
      %p244 = scmp.eq.s32.totalorder %s29, 0
      %p245 = por %p243, %p244
      %s247 = sadd.s32 %s246, 1
      %p250 = scmp.eq.s32.totalorder %s23, 1
      %p251 = scmp.ne.s32.totalorder %s246, %s248
      %p252 = scmp.eq.s32.totalorder %s23, 0
      %p253 = por %p251, %p252
      %p254 = scmp.ne.s32.totalorder %s246, %s248
      %p255 = scmp.eq.s32.totalorder %s28, 1
      %p256 = por %p254, %p255
      %p257 = scmp.ne.s32.totalorder %s248, %s249
      %p258 = scmp.eq.s32.totalorder %s28, 0
      %p259 = por %p257, %p258
      %p260 = scmp.ne.s32.totalorder %s248, %s249
      %p261 = scmp.eq.s32.totalorder %s29, 1
      %p262 = por %p260, %p261
      %p264 = scmp.ne.s32.totalorder %s249, %s263
      %p265 = scmp.eq.s32.totalorder %s29, 0
      %p266 = por %p264, %p265
      %s268 = sadd.s32 %s267, 1
      %p271 = scmp.eq.s32.totalorder %s23, 1
      %p272 = scmp.ne.s32.totalorder %s267, %s269
      %p273 = scmp.eq.s32.totalorder %s23, 0
      %p274 = por %p272, %p273
      %p275 = scmp.ne.s32.totalorder %s267, %s269
      %p276 = scmp.eq.s32.totalorder %s28, 1
      %p277 = por %p275, %p276
      %p278 = scmp.ne.s32.totalorder %s269, %s270
      %p279 = scmp.eq.s32.totalorder %s28, 0
      %p280 = por %p278, %p279
      %p281 = scmp.ne.s32.totalorder %s269, %s270
      %p282 = scmp.eq.s32.totalorder %s29, 1
      %p283 = por %p281, %p282
      %p285 = scmp.ne.s32.totalorder %s270, %s284
      %p286 = scmp.eq.s32.totalorder %s29, 0
      %p287 = por %p285, %p286
      %s288 = ssub.s32 %s23, %s30
      %p289 = scmp.eq.s32.totalorder %s288, 0
      %s291 = sadd.s32 %s290, 1
      %s292 = scalar_select %p289, %s290, %s291
      %p295 = pneg %p289
      %p296 = scmp.eq.s32.totalorder %s23, 1
      %p297 = por %p295, %p296
      %p298 = scmp.ne.s32.totalorder %s290, %s293
      %p299 = scmp.eq.s32.totalorder %s23, 0
      %p300 = por %p298, %p299
      %p301 = scmp.ne.s32.totalorder %s290, %s293
      %p302 = scmp.eq.s32.totalorder %s28, 1
      %p303 = por %p301, %p302
      %p304 = scmp.ne.s32.totalorder %s293, %s294
      %p305 = scmp.eq.s32.totalorder %s28, 0
      %p306 = por %p304, %p305
      %p307 = scmp.ne.s32.totalorder %s293, %s294
      %p308 = scmp.eq.s32.totalorder %s29, 1
      %p309 = por %p307, %p308
      %p311 = scmp.ne.s32.totalorder %s294, %s310
      %p312 = scmp.eq.s32.totalorder %s29, 0
      %p313 = por %p311, %p312
      %p314 = scmp.le.s32.totalorder 1, %s23
      %p315 = scmp.lt.s32.totalorder %s23, 3
      %p316 = pnand %p314, %p315
      %p317 = pneg %p316
      // Predicated region
      $region9: #{my_decoder_forward.1} parent=5 // pred_check
        _
      $region10: #{my_decoder_forward.1} parent=5 // pred_check_branch
        %319 = sbr.rel (%p316) target = $region12
      $region11: #{my_decoder_forward.1} parent=5 // pred_region
        %s320 = ssub.s32 %s23, 1
        // Predicated region
        $region13: #{my_decoder_forward.1} parent=11 // pred_check
          %p321 = pneg %p70
        $region14: #{my_decoder_forward.1} parent=11 // pred_check_branch
          %323 = sbr.rel (%p321) target = $region16
        $region15: #{my_decoder_forward.1} parent=11 // pred_region
          _
        $region16: #{my_decoder_forward.1} parent=11 // pred_fallthru
          _
        // Predicated region
        $region17: #{my_decoder_forward.1} parent=11 // pred_check
          %p324 = pneg %p91
        $region18: #{my_decoder_forward.1} parent=11 // pred_check_branch
          %326 = sbr.rel (%p324) target = $region20
        $region19: #{my_decoder_forward.1} parent=11 // pred_region
          _
        $region20: #{my_decoder_forward.1} parent=11 // pred_fallthru
          _
        // Predicated region
        $region21: #{my_decoder_forward.1} parent=11 // pred_check
          %p327 = pneg %p112
        $region22: #{my_decoder_forward.1} parent=11 // pred_check_branch
          %329 = sbr.rel (%p327) target = $region24
        $region23: #{my_decoder_forward.1} parent=11 // pred_region
          _
        $region24: #{my_decoder_forward.1} parent=11 // pred_fallthru
          _
        // Predicated region
        $region25: #{my_decoder_forward.1} parent=11 // pred_check
          %p330 = pneg %p133
        $region26: #{my_decoder_forward.1} parent=11 // pred_check_branch
          %332 = sbr.rel (%p330) target = $region28
        $region27: #{my_decoder_forward.1} parent=11 // pred_region
          _
        $region28: #{my_decoder_forward.1} parent=11 // pred_fallthru
          _
        // Predicated region
        $region29: #{my_decoder_forward.1} parent=11 // pred_check
          %p333 = pneg %p154
        $region30: #{my_decoder_forward.1} parent=11 // pred_check_branch
          %335 = sbr.rel (%p333) target = $region32
        $region31: #{my_decoder_forward.1} parent=11 // pred_region
          _
        $region32: #{my_decoder_forward.1} parent=11 // pred_fallthru
          _
        // Predicated region
        $region33: #{my_decoder_forward.1} parent=11 // pred_check
          %p336 = pneg %p175
        $region34: #{my_decoder_forward.1} parent=11 // pred_check_branch
          %338 = sbr.rel (%p336) target = $region36
        $region35: #{my_decoder_forward.1} parent=11 // pred_region
          _
        $region36: #{my_decoder_forward.1} parent=11 // pred_fallthru
          _
        // Predicated region
        $region37: #{my_decoder_forward.1} parent=11 // pred_check
          %p339 = pneg %p196
        $region38: #{my_decoder_forward.1} parent=11 // pred_check_branch
          %341 = sbr.rel (%p339) target = $region40
        $region39: #{my_decoder_forward.1} parent=11 // pred_region
          _
        $region40: #{my_decoder_forward.1} parent=11 // pred_fallthru
          _
        // Predicated region
        $region41: #{my_decoder_forward.1} parent=11 // pred_check
          %p342 = pneg %p217
        $region42: #{my_decoder_forward.1} parent=11 // pred_check_branch
          %344 = sbr.rel (%p342) target = $region44
        $region43: #{my_decoder_forward.1} parent=11 // pred_region
          _
        $region44: #{my_decoder_forward.1} parent=11 // pred_fallthru
          _
        // Predicated region
        $region45: #{my_decoder_forward.1} parent=11 // pred_check
          %p345 = pneg %p238
        $region46: #{my_decoder_forward.1} parent=11 // pred_check_branch
          %347 = sbr.rel (%p345) target = $region48
        $region47: #{my_decoder_forward.1} parent=11 // pred_region
          _
        $region48: #{my_decoder_forward.1} parent=11 // pred_fallthru
          _
        // Predicated region
        $region49: #{my_decoder_forward.1} parent=11 // pred_check
          %p348 = pneg %p259
        $region50: #{my_decoder_forward.1} parent=11 // pred_check_branch
          %350 = sbr.rel (%p348) target = $region52
        $region51: #{my_decoder_forward.1} parent=11 // pred_region
          _
        $region52: #{my_decoder_forward.1} parent=11 // pred_fallthru
          _
        // Predicated region
        $region53: #{my_decoder_forward.1} parent=11 // pred_check
          %p351 = pneg %p280
        $region54: #{my_decoder_forward.1} parent=11 // pred_check_branch
          %353 = sbr.rel (%p351) target = $region56
        $region55: #{my_decoder_forward.1} parent=11 // pred_region
          _
        $region56: #{my_decoder_forward.1} parent=11 // pred_fallthru
          _
      $region12: #{my_decoder_forward.1} parent=5 // pred_fallthru
        _
      %p354 = scmp.lt.s32.totalorder %s23, 2
      // Predicated region
      $region57: #{my_decoder_forward.1} parent=5 // pred_check
        %p355 = pneg %p354
      $region58: #{my_decoder_forward.1} parent=5 // pred_check_branch
        %357 = sbr.rel (%p355) target = $region60
      $region59: #{my_decoder_forward.1} parent=5 // pred_region
        // Predicated region
        $region61: #{my_decoder_forward.1} parent=59 // pred_check
          %p358 = pneg %p43
        $region62: #{my_decoder_forward.1} parent=59 // pred_check_branch
          %360 = sbr.rel (%p358) target = $region64
        $region63: #{my_decoder_forward.1} parent=59 // pred_region
          %p361 = scmp.lt.s32.totalorder %s23, 1
          %s362 = scalar_select %p361, %s23, 1
          %s363 = scalar_lea.vmem %s0, %s362
        $region64: #{my_decoder_forward.1} parent=59 // pred_fallthru
          _
      $region60: #{my_decoder_forward.1} parent=5 // pred_fallthru
        _
      %p364 = scmp.le.s32.totalorder 1, %s23
      %p365 = scmp.lt.s32.totalorder %s23, 3
      %p366 = pnand %p364, %p365
      %p367 = pneg %p366
      // Predicated region
      $region65: #{my_decoder_forward.1} parent=5 // pred_check
        _
      $region66: #{my_decoder_forward.1} parent=5 // pred_check_branch
        %369 = sbr.rel (%p366) target = $region68
      $region67: #{my_decoder_forward.1} parent=5 // pred_region
        %s370 = ssub.s32 %s23, 1
        %p371 = scmp.lt.s32.totalorder %s28, 1
        %s372 = scalar_select %p371, %s28, 1
        %s373 = scalar_lea.vmem %s0, %s372
        %p374 = pneg %p49
        %p375 = pneg %p46
        %p376 = pneg %p70
        %p377 = pneg %p67
        %p378 = pneg %p91
        %p379 = pneg %p88
        %p380 = pneg %p112
        %p381 = pneg %p109
        %p382 = pneg %p133
        %p383 = pneg %p130
        %p384 = pneg %p154
        %p385 = pneg %p151
        %p386 = pneg %p175
        %p387 = pneg %p172
        %p388 = pneg %p196
        %p389 = pneg %p193
        %p390 = pneg %p217
        %p391 = pneg %p214
        %p392 = pneg %p238
        %p393 = pneg %p235
        %p394 = pneg %p259
        %p395 = pneg %p256
        %p396 = pneg %p280
        %p397 = pneg %p277
        %p398 = pneg %p306
        %p399 = pneg %p303
        %s400 = sand.u32 %s293, 1
        %s401 = scalar_lea.sflag [#allocation7], %s400
        %s402 = sand.u32 %s293, 1
        %s403 = smul.addr %s402, 2
        %s404 = scalar_lea.vmem [#allocation6], %s403
        %p405 = scmp.lt.s32.totalorder %s28, 1
        %s406 = scalar_select %p405, %s28, 1
        %s407 = scalar_lea.vmem %s0, %s406
        %vm408 = vcmask 532480
        %409 = vst.msk [vmem:[#allocation2] sm:$0x1] %vm408, 0.0
        %v410 = vld [vmem:[%s407] sm:$0x1]
        %v412 = vlaneseq
        %v413 = vshrl.u32 %v412, 7
        %v414 = vsub.s32 0, %v413
        %v415 = vrot.slane %v410, %v414
        %416 = vrot.lane.b32.xlu0 %v415, 1
        %v417 = vpop.permute.xlu0 %416
        %vm419 = vcmask 524296
        %420 = vst.msk [vmem:[#allocation2] sm:$0x1] %vm419, %v417
        %v421 = vld [vmem:[%s1] sm:$0xff]
        %v422 = vld [vmem:[%s1 + $0x8] sm:$0xff]
        %v423 = vld [vmem:[%s2] sm:$0xff]
        %v424 = vld [vmem:[%s2 + $0x8] sm:$0xff]
        %v425 = vld [vmem:[%s3] sm:$0xff]
        %v426 = vld [vmem:[%s3 + $0x8] sm:$0xff]
        %v427 = vld [vmem:[#allocation2] sm:$0x1]
        %429 = vset.pattern.permute.xlu0 0
        %430 = vperm.xlu0 %429, %v421
        %v431 = vpop.permute.xlu0 %430
        %434 = vset.pattern.permute.xlu0 0
        %435 = vperm.xlu0 %434, %v422
        %v436 = vpop.permute.xlu0 %435
        %v439 = vlaneseq
        %v440 = vshrl.u32 %v439, 7
        %v441 = vsub.s32 0, %v440
        %v442 = vrot.slane %v427, %v441
        %v444 = vmul.f32 %v431, %v442
        %v445 = vmul.f32 %v436, %v442
        %446 = vset.pattern.permute.xlu0 1
        %447 = vperm.xlu0 %446, %v421
        %v448 = vpop.permute.xlu0 %447
        %450 = vset.pattern.permute.xlu0 1
        %451 = vperm.xlu0 %450, %v422
        %v452 = vpop.permute.xlu0 %451
        %v454 = vmul.f32 %v448, %v442
        %v455 = vmul.f32 %v452, %v442
        %458 = vrot.lane.b32.xlu0 %v454, 127
        %v459 = vpop.permute.xlu0 %458
        %460 = vrot.lane.b32.xlu0 %v455, 127
        %v461 = vpop.permute.xlu0 %460
        %v464 = vadd.f32 %v444, %v459
        %v465 = vadd.f32 %v445, %v461
        %466 = vset.pattern.permute.xlu0 2
        %467 = vperm.xlu0 %466, %v421
        %v468 = vpop.permute.xlu0 %467
        %470 = vset.pattern.permute.xlu0 2
        %471 = vperm.xlu0 %470, %v422
        %v472 = vpop.permute.xlu0 %471
        %v474 = vmul.f32 %v468, %v442
        %v475 = vmul.f32 %v472, %v442
        %478 = vrot.lane.b32.xlu0 %v474, 126
        %v479 = vpop.permute.xlu0 %478
        %480 = vrot.lane.b32.xlu0 %v475, 126
        %v481 = vpop.permute.xlu0 %480
        %v484 = vadd.f32 %v464, %v479
        %v485 = vadd.f32 %v465, %v481
        %487 = vset.pattern.permute.xlu0 0
        %488 = vperm.xlu0 %487, %v425
        %v489 = vpop.permute.xlu0 %488
        %492 = vset.pattern.permute.xlu0 0
        %493 = vperm.xlu0 %492, %v426
        %v494 = vpop.permute.xlu0 %493
        %v496 = vadd.f32 %v484, %v489
        %v497 = vadd.f32 %v485, %v494
        %499 = vset.pattern.permute.xlu0 0
        %500 = vperm.xlu0 %499, %v423
        %v501 = vpop.permute.xlu0 %500
        %504 = vset.pattern.permute.xlu0 0
        %505 = vperm.xlu0 %504, %v424
        %v506 = vpop.permute.xlu0 %505
        %v508 = vmul.f32 %v501, %v442
        %v509 = vmul.f32 %v506, %v442
        %510 = vset.pattern.permute.xlu0 1
        %511 = vperm.xlu0 %510, %v423
        %v512 = vpop.permute.xlu0 %511
        %514 = vset.pattern.permute.xlu0 1
        %515 = vperm.xlu0 %514, %v424
        %v516 = vpop.permute.xlu0 %515
        %v518 = vmul.f32 %v512, %v442
        %v519 = vmul.f32 %v516, %v442
        %522 = vrot.lane.b32.xlu0 %v518, 127
        %v523 = vpop.permute.xlu0 %522
        %524 = vrot.lane.b32.xlu0 %v519, 127
        %v525 = vpop.permute.xlu0 %524
        %v528 = vadd.f32 %v508, %v523
        %v529 = vadd.f32 %v509, %v525
        %v530 = vadd.f32 %v528, %v489
        %v531 = vadd.f32 %v529, %v494
        %v532 = vmax.f32 %v496, 0.0
        %v533 = vmax.f32 %v497, 0.0
        %v534 = vmax.f32 %v530, 0.0
        %v535 = vmax.f32 %v531, 0.0
        %v536 = vlaneseq
        %v537 = vshrl.u32 %v536, 7
        %v538 = vadd.s32 %v537, 8
        %v539 = vadd.s32 %v537, 16
        %v540 = vadd.s32 %v537, 24
        %v541 = vadd.s32 %v537, 32
        %v542 = vadd.s32 %v537, 40
        %v543 = vadd.s32 %v537, 48
        %v544 = vadd.s32 %v537, 56
        %v545 = vlaneseq
        %v546 = vand.u32 %v545, 127
        %v547 = vmul.u32 %v537, 2
        %v548 = vmul.u32 %v538, 2
        %v549 = vmul.u32 %v539, 2
        %v550 = vmul.u32 %v540, 2
        %v551 = vmul.u32 %v541, 2
        %v552 = vmul.u32 %v542, 2
        %v553 = vmul.u32 %v543, 2
        %v554 = vmul.u32 %v544, 2
        %vm555 = vcmp.eq.s32.totalorder %v546, %v547
        %vm556 = vcmp.eq.s32.totalorder %v546, %v548
        %vm557 = vcmp.eq.s32.totalorder %v546, %v549
        %vm558 = vcmp.eq.s32.totalorder %v546, %v550
        %vm559 = vcmp.eq.s32.totalorder %v546, %v551
        %vm560 = vcmp.eq.s32.totalorder %v546, %v552
        %vm561 = vcmp.eq.s32.totalorder %v546, %v553
        %vm562 = vcmp.eq.s32.totalorder %v546, %v554
        %v563 = vsel %vm555, 1, 0
        %v564 = vsel %vm556, 1, 0
        %v565 = vsel %vm557, 1, 0
        %v566 = vsel %vm558, 1, 0
        %v567 = vsel %vm559, 1, 0
        %v568 = vsel %vm560, 1, 0
        %v569 = vsel %vm561, 1, 0
        %v570 = vsel %vm562, 1, 0
        %v571 = vcvt.s32.f32 %v563
        %v572 = vcvt.s32.f32 %v564
        %v573 = vcvt.s32.f32 %v565
        %v574 = vcvt.s32.f32 %v566
        %v575 = vcvt.s32.f32 %v567
        %v576 = vcvt.s32.f32 %v568
        %v577 = vcvt.s32.f32 %v569
        %v578 = vcvt.s32.f32 %v570
        %v579 = vadd.s32 %v547, 1
        %v580 = vadd.s32 %v548, 1
        %v581 = vadd.s32 %v549, 1
        %v582 = vadd.s32 %v550, 1
        %v583 = vadd.s32 %v551, 1
        %v584 = vadd.s32 %v552, 1
        %v585 = vadd.s32 %v553, 1
        %v586 = vadd.s32 %v554, 1
        %vm587 = vcmp.eq.s32.totalorder %v546, %v579
        %vm588 = vcmp.eq.s32.totalorder %v546, %v580
        %vm589 = vcmp.eq.s32.totalorder %v546, %v581
        %vm590 = vcmp.eq.s32.totalorder %v546, %v582
        %vm591 = vcmp.eq.s32.totalorder %v546, %v583
        %vm592 = vcmp.eq.s32.totalorder %v546, %v584
        %vm593 = vcmp.eq.s32.totalorder %v546, %v585
        %vm594 = vcmp.eq.s32.totalorder %v546, %v586
        %v595 = vsel %vm587, 1, 0
        %v596 = vsel %vm588, 1, 0
        %v597 = vsel %vm589, 1, 0
        %v598 = vsel %vm590, 1, 0
        %v599 = vsel %vm591, 1, 0
        %v600 = vsel %vm592, 1, 0
        %v601 = vsel %vm593, 1, 0
        %v602 = vsel %vm594, 1, 0
        %v603 = vcvt.s32.f32 %v595
        %v604 = vcvt.s32.f32 %v596
        %v605 = vcvt.s32.f32 %v597
        %v606 = vcvt.s32.f32 %v598
        %v607 = vcvt.s32.f32 %v599
        %v608 = vcvt.s32.f32 %v600
        %v609 = vcvt.s32.f32 %v601
        %v610 = vcvt.s32.f32 %v602
        %613 = vrot.lane.b32.xlu0 %v534, 127
        %v614 = vpop.permute.xlu0 %613
        %615 = vrot.lane.b32.xlu0 %v535, 127
        %v616 = vpop.permute.xlu0 %615
        %vm617 = vcmask 523264
        %v618 = vsel %vm617, %v614, 0
        %v620 = vsel %vm617, %v616, 0
        %622 = vmatprep.subr.mxu0 0.0
        %623 = vmatpush1.msra.mxu0 0.0
        %624 = vmatprep.subr.mxu0 0.0
        %625 = vmatpush1.msra.mxu0 0.0
        %626 = vmatprep.subr.mxu0 0.0
        %627 = vmatpush1.msra.mxu0 0.0
        %628 = vmatprep.subr.mxu0 0.0
        %629 = vmatpush1.msra.mxu0 0.0
        %630 = vmatprep.subr.mxu0 0.0
        %631 = vmatpush1.msra.mxu0 0.0
        %632 = vmatprep.subr.mxu0 0.0
        %633 = vmatpush1.msra.mxu0 0.0
        %634 = vmatprep.subr.mxu0 0.0
        %635 = vmatpush1.msra.mxu0 0.0
        %636 = vmatprep.subr.mxu0 0.0
        %637 = vmatpush1.msra.mxu0 0.0
        %638 = vmatprep.subr.mxu0 0.0
        %639 = vmatpush1.msra.mxu0 %v610
        %640 = vmatprep.subr.mxu0 0.0
        %641 = vmatpush1.msra.mxu0 %v609
        %642 = vmatprep.subr.mxu0 0.0
        %643 = vmatpush1.msra.mxu0 %v608
        %644 = vmatprep.subr.mxu0 0.0
        %645 = vmatpush1.msra.mxu0 %v607
        %646 = vmatprep.subr.mxu0 0.0
        %647 = vmatpush1.msra.mxu0 %v606
        %648 = vmatprep.subr.mxu0 0.0
        %649 = vmatpush1.msra.mxu0 %v605
        %650 = vmatprep.subr.mxu0 0.0
        %651 = vmatpush1.msra.mxu0 %v604
        %652 = vmatprep.subr.mxu0 0.0
        %653 = vmatpush1.msra.mxu0 %v603
        %654 = vmatprep.subr.mxu0 0.0
        %655 = vmatpush2.msra.mxu0 0.0
        %656 = vmatprep.subr.mxu0 0.0
        %657 = vmatpush2.msra.mxu0 0.0
        %658 = vmatprep.subr.mxu0 0.0
        %659 = vmatpush2.msra.mxu0 0.0
        %660 = vmatprep.subr.mxu0 0.0
        %661 = vmatpush2.msra.mxu0 0.0
        %662 = vmatprep.subr.mxu0 0.0
        %663 = vmatpush2.msra.mxu0 0.0
        %664 = vmatprep.subr.mxu0 0.0
        %665 = vmatpush2.msra.mxu0 0.0
        %666 = vmatprep.subr.mxu0 0.0
        %667 = vmatpush2.msra.mxu0 0.0
        %668 = vmatprep.subr.mxu0 0.0
        %669 = vmatpush2.msra.mxu0 0.0
        %670 = vmatprep.subr.mxu0 0.0
        %671 = vmatpush2.msra.mxu0 0.0
        %672 = vmatprep.subr.mxu0 0.0
        %673 = vmatpush2.msra.mxu0 0.0
        %674 = vmatprep.subr.mxu0 0.0
        %675 = vmatpush2.msra.mxu0 0.0
        %676 = vmatprep.subr.mxu0 0.0
        %677 = vmatpush2.msra.mxu0 0.0
        %678 = vmatprep.subr.mxu0 0.0
        %679 = vmatpush2.msra.mxu0 0.0
        %680 = vmatprep.subr.mxu0 0.0
        %681 = vmatpush2.msra.mxu0 0.0
        %682 = vmatprep.subr.mxu0 0.0
        %683 = vmatpush2.msra.mxu0 0.0
        %684 = vmatprep.subr.mxu0 0.0
        %685 = vmatpush2.msra.mxu0 0.0
        %686 = vmatprep.mubr.f32.mxu0 0.0
        %687 = vmatmul.mubr.f32.gmra.mxu0 %v618
        %v688 = vpop.f32.mrf.mxu0
        %v689 = vadd.f32 0.0, %v688
        %v690 = vpop.f32.mrf.mxu0
        %691 = vmatprep.mubr.f32.mxu0 0.0
        %692 = vmatmul.mubr.f32.gmra.mxu0 %v620
        %v693 = vpop.f32.mrf.mxu0
        %v694 = vadd.f32 0.0, %v693
        %v695 = vpop.f32.mrf.mxu0
        %696 = vdwg.mxu0
        %v698 = vsel %vm617, %v532, 0
        %v701 = vsel %vm617, %v533, 0
        %703 = vmatprep.subr.mxu0 0.0
        %704 = vmatpush1.msra.mxu0 0.0
        %705 = vmatprep.subr.mxu0 0.0
        %706 = vmatpush1.msra.mxu0 0.0
        %707 = vmatprep.subr.mxu0 0.0
        %708 = vmatpush1.msra.mxu0 0.0
        %709 = vmatprep.subr.mxu0 0.0
        %710 = vmatpush1.msra.mxu0 0.0
        %711 = vmatprep.subr.mxu0 0.0
        %712 = vmatpush1.msra.mxu0 0.0
        %713 = vmatprep.subr.mxu0 0.0
        %714 = vmatpush1.msra.mxu0 0.0
        %715 = vmatprep.subr.mxu0 0.0
        %716 = vmatpush1.msra.mxu0 0.0
        %717 = vmatprep.subr.mxu0 0.0
        %718 = vmatpush1.msra.mxu0 0.0
        %719 = vmatprep.subr.mxu0 0.0
        %720 = vmatpush1.msra.mxu0 %v578
        %721 = vmatprep.subr.mxu0 0.0
        %722 = vmatpush1.msra.mxu0 %v577
        %723 = vmatprep.subr.mxu0 0.0
        %724 = vmatpush1.msra.mxu0 %v576
        %725 = vmatprep.subr.mxu0 0.0
        %726 = vmatpush1.msra.mxu0 %v575
        %727 = vmatprep.subr.mxu0 0.0
        %728 = vmatpush1.msra.mxu0 %v574
        %729 = vmatprep.subr.mxu0 0.0
        %730 = vmatpush1.msra.mxu0 %v573
        %731 = vmatprep.subr.mxu0 0.0
        %732 = vmatpush1.msra.mxu0 %v572
        %733 = vmatprep.subr.mxu0 0.0
        %734 = vmatpush1.msra.mxu0 %v571
        %735 = vmatprep.subr.mxu0 0.0
        %736 = vmatpush2.msra.mxu0 0.0
        %737 = vmatprep.subr.mxu0 0.0
        %738 = vmatpush2.msra.mxu0 0.0
        %739 = vmatprep.subr.mxu0 0.0
        %740 = vmatpush2.msra.mxu0 0.0
        %741 = vmatprep.subr.mxu0 0.0
        %742 = vmatpush2.msra.mxu0 0.0
        %743 = vmatprep.subr.mxu0 0.0
        %744 = vmatpush2.msra.mxu0 0.0
        %745 = vmatprep.subr.mxu0 0.0
        %746 = vmatpush2.msra.mxu0 0.0
        %747 = vmatprep.subr.mxu0 0.0
        %748 = vmatpush2.msra.mxu0 0.0
        %749 = vmatprep.subr.mxu0 0.0
        %750 = vmatpush2.msra.mxu0 0.0
        %751 = vmatprep.subr.mxu0 0.0
        %752 = vmatpush2.msra.mxu0 0.0
        %753 = vmatprep.subr.mxu0 0.0
        %754 = vmatpush2.msra.mxu0 0.0
        %755 = vmatprep.subr.mxu0 0.0
        %756 = vmatpush2.msra.mxu0 0.0
        %757 = vmatprep.subr.mxu0 0.0
        %758 = vmatpush2.msra.mxu0 0.0
        %759 = vmatprep.subr.mxu0 0.0
        %760 = vmatpush2.msra.mxu0 0.0
        %761 = vmatprep.subr.mxu0 0.0
        %762 = vmatpush2.msra.mxu0 0.0
        %763 = vmatprep.subr.mxu0 0.0
        %764 = vmatpush2.msra.mxu0 0.0
        %765 = vmatprep.subr.mxu0 0.0
        %766 = vmatpush2.msra.mxu0 0.0
        %767 = vmatprep.mubr.f32.mxu0 0.0
        %768 = vmatmul.mubr.f32.gmra.mxu0 %v698
        %v769 = vpop.f32.mrf.mxu0
        %v770 = vadd.f32 %v689, %v769
        %v771 = vpop.f32.mrf.mxu0
        %772 = vmatprep.mubr.f32.mxu0 0.0
        %773 = vmatmul.mubr.f32.gmra.mxu0 %v701
        %v774 = vpop.f32.mrf.mxu0
        %v775 = vadd.f32 %v694, %v774
        %v776 = vpop.f32.mrf.mxu0
        %777 = vdwg.mxu0
        %778 = vst [vmem:[#allocation3] sm:$0xff] 0.0
        %779 = vst [vmem:[#allocation3 + $0x8] sm:$0xff] 0.0
        %vm780 = vcmask 15360
        %781 = vst.msk [vmem:[#allocation3 + $0x10] sm:$0xff] %vm780, 0.0
        %782 = vst [vmem:[#allocation3 + $0x18] sm:$0xff] 0.0
        %783 = vst [vmem:[#allocation3 + $0x20] sm:$0xff] 0.0
        %784 = vst.msk [vmem:[#allocation3 + $0x28] sm:$0xff] %vm780, 0.0
        %787 = vrot.lane.b32.xlu0 %v770, 1
        %v788 = vpop.permute.xlu0 %787
        %789 = vrot.lane.b32.xlu0 %v775, 1
        %v790 = vpop.permute.xlu0 %789
        %vm793 = vcmask 1047560
        %794 = vst.msk [vmem:[#allocation3] sm:$0xff] %vm793, %v788
        %vm795 = vcmask 7168
        %796 = vst.msk [vmem:[#allocation3 + $0x8] sm:$0xff] %vm795, %v788
        %797 = vst.msk [vmem:[#allocation3 + $0x18] sm:$0xff] %vm793, %v790
        %798 = vst.msk [vmem:[#allocation3 + $0x20] sm:$0xff] %vm795, %v790
        %v799 = vld [vmem:[#allocation3] sm:$0xff]
        %v800 = vld [vmem:[#allocation3 + $0x18] sm:$0xff]
        %801 = vst [vmem:[#allocation4] sm:$0xff] %v799
        %802 = vst [vmem:[#allocation4 + $0x10] sm:$0xff] %v800
        %v803 = vld [vmem:[#allocation3] sm:$0xff]
        %v804 = vld [vmem:[#allocation3 + $0x8] sm:$0xff]
        %v805 = vld [vmem:[#allocation3 + $0x18] sm:$0xff]
        %v806 = vld [vmem:[#allocation3 + $0x20] sm:$0xff]
        %811 = vrot.lane.b32.xlu0 %v803, 127
        %v812 = vpop.permute.xlu0 %811
        %813 = vrot.lane.b32.xlu0 %v804, 127
        %v814 = vpop.permute.xlu0 %813
        %815 = vrot.lane.b32.xlu0 %v805, 127
        %v816 = vpop.permute.xlu0 %815
        %817 = vrot.lane.b32.xlu0 %v806, 127
        %v818 = vpop.permute.xlu0 %817
        %vm819 = vcmask 1039360
        %v820 = vsel %vm819, %v812, %v814
        %v821 = vsel %vm819, %v816, %v818
        %824 = vst [vmem:[#allocation4 + $0x20] sm:$0xff] %v820
        %825 = vst [vmem:[#allocation4 + $0x30] sm:$0xff] %v821
        %v826 = vld [vmem:[#allocation3] sm:$0xff]
        %v827 = vld [vmem:[#allocation3 + $0x8] sm:$0xff]
        %v828 = vld [vmem:[#allocation3 + $0x18] sm:$0xff]
        %v829 = vld [vmem:[#allocation3 + $0x20] sm:$0xff]
        %834 = vrot.lane.b32.xlu0 %v826, 126
        %v835 = vpop.permute.xlu0 %834
        %836 = vrot.lane.b32.xlu0 %v827, 126
        %v837 = vpop.permute.xlu0 %836
        %838 = vrot.lane.b32.xlu0 %v828, 126
        %v839 = vpop.permute.xlu0 %838
        %840 = vrot.lane.b32.xlu0 %v829, 126
        %v841 = vpop.permute.xlu0 %840
        %vm842 = vcmask 1031168
        %v843 = vsel %vm842, %v835, %v837
        %v844 = vsel %vm842, %v839, %v841
        %847 = vst [vmem:[#allocation4 + $0x40] sm:$0xff] %v843
        %848 = vst [vmem:[#allocation4 + $0x50] sm:$0xff] %v844
        %v849 = vld [vmem:[%s4] sm:$0xff]
        %v850 = vld [vmem:[%s4 + $0x8] sm:$0xff]
        %v851 = vld [vmem:[#allocation4] sm:$0xff]
        %v852 = vld [vmem:[#allocation4 + $0x10] sm:$0xff]
        %v853 = vld [vmem:[#allocation4 + $0x20] sm:$0xff]
        %v854 = vld [vmem:[#allocation4 + $0x30] sm:$0xff]
        %v855 = vld [vmem:[#allocation4 + $0x40] sm:$0xff]
        %v856 = vld [vmem:[#allocation4 + $0x50] sm:$0xff]
        %v857 = vld [vmem:[%s5] sm:$0xff]
        %v858 = vld [vmem:[%s5 + $0x8] sm:$0xff]
        %860 = vset.pattern.permute.xlu0 0
        %861 = vperm.xlu0 %860, %v857
        %v862 = vpop.permute.xlu0 %861
        %865 = vset.pattern.permute.xlu0 0
        %866 = vperm.xlu0 %865, %v858
        %v867 = vpop.permute.xlu0 %866
        %vm869 = vcmask 392192
        %v871 = vsel %vm869, %v849, 0
        %v874 = vsel %vm869, %v850, 0
        %876 = vmatprep.subr.mxu0 0.0
        %877 = vmatpush1.msra.mxu0 0.0
        %878 = vmatprep.subr.mxu0 0.0
        %879 = vmatpush1.msra.mxu0 0.0
        %880 = vmatprep.subr.mxu0 0.0
        %881 = vmatpush1.msra.mxu0 0.0
        %882 = vmatprep.subr.mxu0 0.0
        %883 = vmatpush1.msra.mxu0 0.0
        %884 = vmatprep.subr.mxu0 0.0
        %885 = vmatpush1.msra.mxu0 0.0
        %886 = vmatprep.subr.mxu0 0.0
        %887 = vmatpush1.msra.mxu0 0.0
        %888 = vmatprep.subr.mxu0 0.0
        %889 = vmatpush1.msra.mxu0 0.0
        %890 = vmatprep.subr.mxu0 0.0
        %891 = vmatpush1.msra.mxu0 0.0
        %892 = vmatprep.subr.mxu0 0.0
        %893 = vmatpush1.msra.mxu0 0.0
        %894 = vmatprep.subr.mxu0 0.0
        %895 = vmatpush1.msra.mxu0 0.0
        %896 = vmatprep.subr.mxu0 0.0
        %897 = vmatpush1.msra.mxu0 %v856
        %898 = vmatprep.subr.mxu0 0.0
        %899 = vmatpush1.msra.mxu0 %v855
        %900 = vmatprep.subr.mxu0 0.0
        %901 = vmatpush1.msra.mxu0 %v854
        %902 = vmatprep.subr.mxu0 0.0
        %903 = vmatpush1.msra.mxu0 %v853
        %904 = vmatprep.subr.mxu0 0.0
        %905 = vmatpush1.msra.mxu0 %v852
        %906 = vmatprep.subr.mxu0 0.0
        %907 = vmatpush1.msra.mxu0 %v851
        %908 = vmatprep.subr.mxu0 0.0
        %909 = vmatpush2.msra.mxu0 0.0
        %910 = vmatprep.subr.mxu0 0.0
        %911 = vmatpush2.msra.mxu0 0.0
        %912 = vmatprep.subr.mxu0 0.0
        %913 = vmatpush2.msra.mxu0 0.0
        %914 = vmatprep.subr.mxu0 0.0
        %915 = vmatpush2.msra.mxu0 0.0
        %916 = vmatprep.subr.mxu0 0.0
        %917 = vmatpush2.msra.mxu0 0.0
        %918 = vmatprep.subr.mxu0 0.0
        %919 = vmatpush2.msra.mxu0 0.0
        %920 = vmatprep.subr.mxu0 0.0
        %921 = vmatpush2.msra.mxu0 0.0
        %922 = vmatprep.subr.mxu0 0.0
        %923 = vmatpush2.msra.mxu0 0.0
        %924 = vmatprep.subr.mxu0 0.0
        %925 = vmatpush2.msra.mxu0 0.0
        %926 = vmatprep.subr.mxu0 0.0
        %927 = vmatpush2.msra.mxu0 0.0
        %928 = vmatprep.subr.mxu0 0.0
        %929 = vmatpush2.msra.mxu0 0.0
        %930 = vmatprep.subr.mxu0 0.0
        %931 = vmatpush2.msra.mxu0 0.0
        %932 = vmatprep.subr.mxu0 0.0
        %933 = vmatpush2.msra.mxu0 0.0
        %934 = vmatprep.subr.mxu0 0.0
        %935 = vmatpush2.msra.mxu0 0.0
        %936 = vmatprep.subr.mxu0 0.0
        %937 = vmatpush2.msra.mxu0 0.0
        %938 = vmatprep.subr.mxu0 0.0
        %939 = vmatpush2.msra.mxu0 0.0
        %940 = vmatprep.mubr.f32.mxu0 0.0
        %941 = vmatmul.mubr.f32.gmra.mxu0 %v871
        %v942 = vpop.f32.mrf.mxu0
        %v943 = vadd.f32 %v862, %v942
        %v944 = vpop.f32.mrf.mxu0
        %945 = vmatprep.mubr.f32.mxu0 0.0
        %946 = vmatmul.mubr.f32.gmra.mxu0 %v874
        %v947 = vpop.f32.mrf.mxu0
        %v948 = vadd.f32 %v867, %v947
        %v949 = vpop.f32.mrf.mxu0
        %950 = vdwg.mxu0
        %953 = vrot.lane.b32.xlu0 %v943, 1
        %v954 = vpop.permute.xlu0 %953
        %955 = vrot.lane.b32.xlu0 %v948, 1
        %v956 = vpop.permute.xlu0 %955
        %959 = vst.msk [vmem:[#allocation3] sm:$0xff] %vm793, %v954
        %960 = vst.msk [vmem:[#allocation3 + $0x8] sm:$0xff] %vm795, %v954
        %961 = vst.msk [vmem:[#allocation3 + $0x18] sm:$0xff] %vm793, %v956
        %962 = vst.msk [vmem:[#allocation3 + $0x20] sm:$0xff] %vm795, %v956
        %v963 = vld [vmem:[#allocation3] sm:$0xff]
        %v964 = vld [vmem:[#allocation3 + $0x18] sm:$0xff]
        %965 = vst [vmem:[#allocation4] sm:$0xff] %v963
        %966 = vst [vmem:[#allocation4 + $0x10] sm:$0xff] %v964
        %v967 = vld [vmem:[#allocation3] sm:$0xff]
        %v968 = vld [vmem:[#allocation3 + $0x8] sm:$0xff]
        %v969 = vld [vmem:[#allocation3 + $0x18] sm:$0xff]
        %v970 = vld [vmem:[#allocation3 + $0x20] sm:$0xff]
        %975 = vrot.lane.b32.xlu0 %v967, 127
        %v976 = vpop.permute.xlu0 %975
        %977 = vrot.lane.b32.xlu0 %v968, 127
        %v978 = vpop.permute.xlu0 %977
        %979 = vrot.lane.b32.xlu0 %v969, 127
        %v980 = vpop.permute.xlu0 %979
        %981 = vrot.lane.b32.xlu0 %v970, 127
        %v982 = vpop.permute.xlu0 %981
        %v983 = vsel %vm819, %v976, %v978
        %v984 = vsel %vm819, %v980, %v982
        %987 = vst [vmem:[#allocation4 + $0x20] sm:$0xff] %v983
        %988 = vst [vmem:[#allocation4 + $0x30] sm:$0xff] %v984
        %v989 = vld [vmem:[#allocation3] sm:$0xff]
        %v990 = vld [vmem:[#allocation3 + $0x8] sm:$0xff]
        %v991 = vld [vmem:[#allocation3 + $0x18] sm:$0xff]
        %v992 = vld [vmem:[#allocation3 + $0x20] sm:$0xff]
        %997 = vrot.lane.b32.xlu0 %v989, 126
        %v998 = vpop.permute.xlu0 %997
        %999 = vrot.lane.b32.xlu0 %v990, 126
        %v1000 = vpop.permute.xlu0 %999
        %1001 = vrot.lane.b32.xlu0 %v991, 126
        %v1002 = vpop.permute.xlu0 %1001
        %1003 = vrot.lane.b32.xlu0 %v992, 126
        %v1004 = vpop.permute.xlu0 %1003
        %v1005 = vsel %vm842, %v998, %v1000
        %v1006 = vsel %vm842, %v1002, %v1004
        %1009 = vst [vmem:[#allocation4 + $0x40] sm:$0xff] %v1005
        %1010 = vst [vmem:[#allocation4 + $0x50] sm:$0xff] %v1006
        %v1011 = vld [vmem:[%s6] sm:$0xff]
        %v1012 = vld [vmem:[%s6 + $0x8] sm:$0xff]
        %v1013 = vld [vmem:[%s6 + $0x10] sm:$0xff]
        %v1014 = vld [vmem:[%s6 + $0x18] sm:$0xff]
        %v1015 = vld [vmem:[#allocation4] sm:$0xff]
        %v1016 = vld [vmem:[#allocation4 + $0x10] sm:$0xff]
        %v1017 = vld [vmem:[#allocation4 + $0x20] sm:$0xff]
        %v1018 = vld [vmem:[#allocation4 + $0x30] sm:$0xff]
        %v1019 = vld [vmem:[#allocation4 + $0x40] sm:$0xff]
        %v1020 = vld [vmem:[#allocation4 + $0x50] sm:$0xff]
        %v1021 = vld [vmem:[%s7] sm:$0xff]
        %v1022 = vld [vmem:[%s7 + $0x8] sm:$0xff]
        %v1023 = vld [vmem:[%s7 + $0x10] sm:$0xff]
        %v1024 = vld [vmem:[%s7 + $0x18] sm:$0xff]
        %1026 = vset.pattern.permute.xlu0 0
        %1027 = vperm.xlu0 %1026, %v1021
        %v1028 = vpop.permute.xlu0 %1027
        %1031 = vset.pattern.permute.xlu0 0
        %1032 = vperm.xlu0 %1031, %v1022
        %v1033 = vpop.permute.xlu0 %1032
        %1036 = vset.pattern.permute.xlu0 0
        %1037 = vperm.xlu0 %1036, %v1023
        %v1038 = vpop.permute.xlu0 %1037
        %1041 = vset.pattern.permute.xlu0 0
        %1042 = vperm.xlu0 %1041, %v1024
        %v1043 = vpop.permute.xlu0 %1042
        %v1046 = vsel %vm869, %v1011, 0
        %v1049 = vsel %vm869, %v1012, 0
        %v1052 = vsel %vm869, %v1013, 0
        %v1055 = vsel %vm869, %v1014, 0
        %1057 = vmatprep.subr.mxu0 0.0
        %1058 = vmatpush1.msra.mxu0 0.0
        %1059 = vmatprep.subr.mxu0 0.0
        %1060 = vmatpush1.msra.mxu0 0.0
        %1061 = vmatprep.subr.mxu0 0.0
        %1062 = vmatpush1.msra.mxu0 0.0
        %1063 = vmatprep.subr.mxu0 0.0
        %1064 = vmatpush1.msra.mxu0 0.0
        %1065 = vmatprep.subr.mxu0 0.0
        %1066 = vmatpush1.msra.mxu0 0.0
        %1067 = vmatprep.subr.mxu0 0.0
        %1068 = vmatpush1.msra.mxu0 0.0
        %1069 = vmatprep.subr.mxu0 0.0
        %1070 = vmatpush1.msra.mxu0 0.0
        %1071 = vmatprep.subr.mxu0 0.0
        %1072 = vmatpush1.msra.mxu0 0.0
        %1073 = vmatprep.subr.mxu0 0.0
        %1074 = vmatpush1.msra.mxu0 0.0
        %1075 = vmatprep.subr.mxu0 0.0
        %1076 = vmatpush1.msra.mxu0 0.0
        %1077 = vmatprep.subr.mxu0 0.0
        %1078 = vmatpush1.msra.mxu0 %v1020
        %1079 = vmatprep.subr.mxu0 0.0
        %1080 = vmatpush1.msra.mxu0 %v1019
        %1081 = vmatprep.subr.mxu0 0.0
        %1082 = vmatpush1.msra.mxu0 %v1018
        %1083 = vmatprep.subr.mxu0 0.0
        %1084 = vmatpush1.msra.mxu0 %v1017
        %1085 = vmatprep.subr.mxu0 0.0
        %1086 = vmatpush1.msra.mxu0 %v1016
        %1087 = vmatprep.subr.mxu0 0.0
        %1088 = vmatpush1.msra.mxu0 %v1015
        %1089 = vmatprep.subr.mxu0 0.0
        %1090 = vmatpush2.msra.mxu0 0.0
        %1091 = vmatprep.subr.mxu0 0.0
        %1092 = vmatpush2.msra.mxu0 0.0
        %1093 = vmatprep.subr.mxu0 0.0
        %1094 = vmatpush2.msra.mxu0 0.0
        %1095 = vmatprep.subr.mxu0 0.0
        %1096 = vmatpush2.msra.mxu0 0.0
        %1097 = vmatprep.subr.mxu0 0.0
        %1098 = vmatpush2.msra.mxu0 0.0
        %1099 = vmatprep.subr.mxu0 0.0
        %1100 = vmatpush2.msra.mxu0 0.0
        %1101 = vmatprep.subr.mxu0 0.0
        %1102 = vmatpush2.msra.mxu0 0.0
        %1103 = vmatprep.subr.mxu0 0.0
        %1104 = vmatpush2.msra.mxu0 0.0
        %1105 = vmatprep.subr.mxu0 0.0
        %1106 = vmatpush2.msra.mxu0 0.0
        %1107 = vmatprep.subr.mxu0 0.0
        %1108 = vmatpush2.msra.mxu0 0.0
        %1109 = vmatprep.subr.mxu0 0.0
        %1110 = vmatpush2.msra.mxu0 0.0
        %1111 = vmatprep.subr.mxu0 0.0
        %1112 = vmatpush2.msra.mxu0 0.0
        %1113 = vmatprep.subr.mxu0 0.0
        %1114 = vmatpush2.msra.mxu0 0.0
        %1115 = vmatprep.subr.mxu0 0.0
        %1116 = vmatpush2.msra.mxu0 0.0
        %1117 = vmatprep.subr.mxu0 0.0
        %1118 = vmatpush2.msra.mxu0 0.0
        %1119 = vmatprep.subr.mxu0 0.0
        %1120 = vmatpush2.msra.mxu0 0.0
        %1121 = vmatprep.mubr.f32.mxu0 0.0
        %1122 = vmatmul.mubr.f32.gmra.mxu0 %v1046
        %v1123 = vpop.f32.mrf.mxu0
        %v1124 = vadd.f32 %v1028, %v1123
        %v1125 = vpop.f32.mrf.mxu0
        %1126 = vmatprep.mubr.f32.mxu0 0.0
        %1127 = vmatmul.mubr.f32.gmra.mxu0 %v1049
        %v1128 = vpop.f32.mrf.mxu0
        %v1129 = vadd.f32 %v1033, %v1128
        %v1130 = vpop.f32.mrf.mxu0
        %1131 = vmatprep.mubr.f32.mxu0 0.0
        %1132 = vmatmul.mubr.f32.gmra.mxu0 %v1052
        %v1133 = vpop.f32.mrf.mxu0
        %v1134 = vadd.f32 %v1038, %v1133
        %v1135 = vpop.f32.mrf.mxu0
        %1136 = vmatprep.mubr.f32.mxu0 0.0
        %1137 = vmatmul.mubr.f32.gmra.mxu0 %v1055
        %v1138 = vpop.f32.mrf.mxu0
        %v1139 = vadd.f32 %v1043, %v1138
        %v1140 = vpop.f32.mrf.mxu0
        %1141 = vdwg.mxu0
        %v1142 = vmax.f32 %v1124, 0.0
        %v1143 = vmax.f32 %v1129, 0.0
        %v1144 = vmax.f32 %v1134, 0.0
        %v1145 = vmax.f32 %v1139, 0.0
        %v1146 = vadd.s32 %v537, 64
        %v1147 = vadd.s32 %v537, 72
        %v1148 = vadd.s32 %v537, 80
        %v1149 = vadd.s32 %v537, 88
        %v1150 = vadd.s32 %v537, 96
        %v1151 = vadd.s32 %v537, 104
        %v1152 = vadd.s32 %v537, 112
        %v1153 = vadd.s32 %v537, 120
        %v1154 = vadd.s32 %v546, 128
        %v1155 = vmul.u32 %v1146, 2
        %v1156 = vmul.u32 %v1147, 2
        %v1157 = vmul.u32 %v1148, 2
        %v1158 = vmul.u32 %v1149, 2
        %v1159 = vmul.u32 %v1150, 2
        %v1160 = vmul.u32 %v1151, 2
        %v1161 = vmul.u32 %v1152, 2
        %v1162 = vmul.u32 %v1153, 2
        %vm1163 = vcmp.eq.s32.totalorder %v1154, %v547
        %vm1164 = vcmp.eq.s32.totalorder %v1154, %v548
        %vm1165 = vcmp.eq.s32.totalorder %v1154, %v549
        %vm1166 = vcmp.eq.s32.totalorder %v1154, %v550
        %vm1167 = vcmp.eq.s32.totalorder %v1154, %v551
        %vm1168 = vcmp.eq.s32.totalorder %v1154, %v552
        %vm1169 = vcmp.eq.s32.totalorder %v1154, %v553
        %vm1170 = vcmp.eq.s32.totalorder %v1154, %v554
        %vm1171 = vcmp.eq.s32.totalorder %v546, %v1155
        %vm1172 = vcmp.eq.s32.totalorder %v1154, %v1155
        %vm1173 = vcmp.eq.s32.totalorder %v546, %v1156
        %vm1174 = vcmp.eq.s32.totalorder %v1154, %v1156
        %vm1175 = vcmp.eq.s32.totalorder %v546, %v1157
        %vm1176 = vcmp.eq.s32.totalorder %v1154, %v1157
        %vm1177 = vcmp.eq.s32.totalorder %v546, %v1158
        %vm1178 = vcmp.eq.s32.totalorder %v1154, %v1158
        %vm1179 = vcmp.eq.s32.totalorder %v546, %v1159
        %vm1180 = vcmp.eq.s32.totalorder %v1154, %v1159
        %vm1181 = vcmp.eq.s32.totalorder %v546, %v1160
        %vm1182 = vcmp.eq.s32.totalorder %v1154, %v1160
        %vm1183 = vcmp.eq.s32.totalorder %v546, %v1161
        %vm1184 = vcmp.eq.s32.totalorder %v1154, %v1161
        %vm1185 = vcmp.eq.s32.totalorder %v546, %v1162
        %vm1186 = vcmp.eq.s32.totalorder %v1154, %v1162
        %v1187 = vsel %vm1163, 1, 0
        %v1188 = vsel %vm1164, 1, 0
        %v1189 = vsel %vm1165, 1, 0
        %v1190 = vsel %vm1166, 1, 0
        %v1191 = vsel %vm1167, 1, 0
        %v1192 = vsel %vm1168, 1, 0
        %v1193 = vsel %vm1169, 1, 0
        %v1194 = vsel %vm1170, 1, 0
        %v1195 = vsel %vm1171, 1, 0
        %v1196 = vsel %vm1172, 1, 0
        %v1197 = vsel %vm1173, 1, 0
        %v1198 = vsel %vm1174, 1, 0
        %v1199 = vsel %vm1175, 1, 0
        %v1200 = vsel %vm1176, 1, 0
        %v1201 = vsel %vm1177, 1, 0
        %v1202 = vsel %vm1178, 1, 0
        %v1203 = vsel %vm1179, 1, 0
        %v1204 = vsel %vm1180, 1, 0
        %v1205 = vsel %vm1181, 1, 0
        %v1206 = vsel %vm1182, 1, 0
        %v1207 = vsel %vm1183, 1, 0
        %v1208 = vsel %vm1184, 1, 0
        %v1209 = vsel %vm1185, 1, 0
        %v1210 = vsel %vm1186, 1, 0
        %v1211 = vcvt.s32.f32 %v1187
        %v1212 = vcvt.s32.f32 %v1188
        %v1213 = vcvt.s32.f32 %v1189
        %v1214 = vcvt.s32.f32 %v1190
        %v1215 = vcvt.s32.f32 %v1191
        %v1216 = vcvt.s32.f32 %v1192
        %v1217 = vcvt.s32.f32 %v1193
        %v1218 = vcvt.s32.f32 %v1194
        %v1219 = vcvt.s32.f32 %v1195
        %v1220 = vcvt.s32.f32 %v1196
        %v1221 = vcvt.s32.f32 %v1197
        %v1222 = vcvt.s32.f32 %v1198
        %v1223 = vcvt.s32.f32 %v1199
        %v1224 = vcvt.s32.f32 %v1200
        %v1225 = vcvt.s32.f32 %v1201
        %v1226 = vcvt.s32.f32 %v1202
        %v1227 = vcvt.s32.f32 %v1203
        %v1228 = vcvt.s32.f32 %v1204
        %v1229 = vcvt.s32.f32 %v1205
        %v1230 = vcvt.s32.f32 %v1206
        %v1231 = vcvt.s32.f32 %v1207
        %v1232 = vcvt.s32.f32 %v1208
        %v1233 = vcvt.s32.f32 %v1209
        %v1234 = vcvt.s32.f32 %v1210
        %v1235 = vadd.s32 %v1155, 1
        %v1236 = vadd.s32 %v1156, 1
        %v1237 = vadd.s32 %v1157, 1
        %v1238 = vadd.s32 %v1158, 1
        %v1239 = vadd.s32 %v1159, 1
        %v1240 = vadd.s32 %v1160, 1
        %v1241 = vadd.s32 %v1161, 1
        %v1242 = vadd.s32 %v1162, 1
        %vm1243 = vcmp.eq.s32.totalorder %v1154, %v579
        %vm1244 = vcmp.eq.s32.totalorder %v1154, %v580
        %vm1245 = vcmp.eq.s32.totalorder %v1154, %v581
        %vm1246 = vcmp.eq.s32.totalorder %v1154, %v582
        %vm1247 = vcmp.eq.s32.totalorder %v1154, %v583
        %vm1248 = vcmp.eq.s32.totalorder %v1154, %v584
        %vm1249 = vcmp.eq.s32.totalorder %v1154, %v585
        %vm1250 = vcmp.eq.s32.totalorder %v1154, %v586
        %vm1251 = vcmp.eq.s32.totalorder %v546, %v1235
        %vm1252 = vcmp.eq.s32.totalorder %v1154, %v1235
        %vm1253 = vcmp.eq.s32.totalorder %v546, %v1236
        %vm1254 = vcmp.eq.s32.totalorder %v1154, %v1236
        %vm1255 = vcmp.eq.s32.totalorder %v546, %v1237
        %vm1256 = vcmp.eq.s32.totalorder %v1154, %v1237
        %vm1257 = vcmp.eq.s32.totalorder %v546, %v1238
        %vm1258 = vcmp.eq.s32.totalorder %v1154, %v1238
        %vm1259 = vcmp.eq.s32.totalorder %v546, %v1239
        %vm1260 = vcmp.eq.s32.totalorder %v1154, %v1239
        %vm1261 = vcmp.eq.s32.totalorder %v546, %v1240
        %vm1262 = vcmp.eq.s32.totalorder %v1154, %v1240
        %vm1263 = vcmp.eq.s32.totalorder %v546, %v1241
        %vm1264 = vcmp.eq.s32.totalorder %v1154, %v1241
        %vm1265 = vcmp.eq.s32.totalorder %v546, %v1242
        %vm1266 = vcmp.eq.s32.totalorder %v1154, %v1242
        %v1267 = vsel %vm1243, 1, 0
        %v1268 = vsel %vm1244, 1, 0
        %v1269 = vsel %vm1245, 1, 0
        %v1270 = vsel %vm1246, 1, 0
        %v1271 = vsel %vm1247, 1, 0
        %v1272 = vsel %vm1248, 1, 0
        %v1273 = vsel %vm1249, 1, 0
        %v1274 = vsel %vm1250, 1, 0
        %v1275 = vsel %vm1251, 1, 0
        %v1276 = vsel %vm1252, 1, 0
        %v1277 = vsel %vm1253, 1, 0
        %v1278 = vsel %vm1254, 1, 0
        %v1279 = vsel %vm1255, 1, 0
        %v1280 = vsel %vm1256, 1, 0
        %v1281 = vsel %vm1257, 1, 0
        %v1282 = vsel %vm1258, 1, 0
        %v1283 = vsel %vm1259, 1, 0
        %v1284 = vsel %vm1260, 1, 0
        %v1285 = vsel %vm1261, 1, 0
        %v1286 = vsel %vm1262, 1, 0
        %v1287 = vsel %vm1263, 1, 0
        %v1288 = vsel %vm1264, 1, 0
        %v1289 = vsel %vm1265, 1, 0
        %v1290 = vsel %vm1266, 1, 0
        %v1291 = vcvt.s32.f32 %v1267
        %v1292 = vcvt.s32.f32 %v1268
        %v1293 = vcvt.s32.f32 %v1269
        %v1294 = vcvt.s32.f32 %v1270
        %v1295 = vcvt.s32.f32 %v1271
        %v1296 = vcvt.s32.f32 %v1272
        %v1297 = vcvt.s32.f32 %v1273
        %v1298 = vcvt.s32.f32 %v1274
        %v1299 = vcvt.s32.f32 %v1275
        %v1300 = vcvt.s32.f32 %v1276
        %v1301 = vcvt.s32.f32 %v1277
        %v1302 = vcvt.s32.f32 %v1278
        %v1303 = vcvt.s32.f32 %v1279
        %v1304 = vcvt.s32.f32 %v1280
        %v1305 = vcvt.s32.f32 %v1281
        %v1306 = vcvt.s32.f32 %v1282
        %v1307 = vcvt.s32.f32 %v1283
        %v1308 = vcvt.s32.f32 %v1284
        %v1309 = vcvt.s32.f32 %v1285
        %v1310 = vcvt.s32.f32 %v1286
        %v1311 = vcvt.s32.f32 %v1287
        %v1312 = vcvt.s32.f32 %v1288
        %v1313 = vcvt.s32.f32 %v1289
        %v1314 = vcvt.s32.f32 %v1290
        %1315 = vmatprep.subr.mxu0 %v1314
        %1316 = vmatpush1.msra.mxu0 %v1313
        %1317 = vmatprep.subr.mxu0 %v1312
        %1318 = vmatpush1.msra.mxu0 %v1311
        %1319 = vmatprep.subr.mxu0 %v1310
        %1320 = vmatpush1.msra.mxu0 %v1309
        %1321 = vmatprep.subr.mxu0 %v1308
        %1322 = vmatpush1.msra.mxu0 %v1307
        %1323 = vmatprep.subr.mxu0 %v1306
        %1324 = vmatpush1.msra.mxu0 %v1305
        %1325 = vmatprep.subr.mxu0 %v1304
        %1326 = vmatpush1.msra.mxu0 %v1303
        %1327 = vmatprep.subr.mxu0 %v1302
        %1328 = vmatpush1.msra.mxu0 %v1301
        %1329 = vmatprep.subr.mxu0 %v1300
        %1330 = vmatpush1.msra.mxu0 %v1299
        %1331 = vmatprep.subr.mxu0 %v1298
        %1332 = vmatpush1.msra.mxu0 %v610
        %1333 = vmatprep.subr.mxu0 %v1297
        %1334 = vmatpush1.msra.mxu0 %v609
        %1335 = vmatprep.subr.mxu0 %v1296
        %1336 = vmatpush1.msra.mxu0 %v608
        %1337 = vmatprep.subr.mxu0 %v1295
        %1338 = vmatpush1.msra.mxu0 %v607
        %1339 = vmatprep.subr.mxu0 %v1294
        %1340 = vmatpush1.msra.mxu0 %v606
        %1341 = vmatprep.subr.mxu0 %v1293
        %1342 = vmatpush1.msra.mxu0 %v605
        %1343 = vmatprep.subr.mxu0 %v1292
        %1344 = vmatpush1.msra.mxu0 %v604
        %1345 = vmatprep.subr.mxu0 %v1291
        %1346 = vmatpush1.msra.mxu0 %v603
        %1347 = vmatprep.subr.mxu0 0.0
        %1348 = vmatpush2.msra.mxu0 0.0
        %1349 = vmatprep.subr.mxu0 0.0
        %1350 = vmatpush2.msra.mxu0 0.0
        %1351 = vmatprep.subr.mxu0 0.0
        %1352 = vmatpush2.msra.mxu0 0.0
        %1353 = vmatprep.subr.mxu0 0.0
        %1354 = vmatpush2.msra.mxu0 0.0
        %1355 = vmatprep.subr.mxu0 0.0
        %1356 = vmatpush2.msra.mxu0 0.0
        %1357 = vmatprep.subr.mxu0 0.0
        %1358 = vmatpush2.msra.mxu0 0.0
        %1359 = vmatprep.subr.mxu0 0.0
        %1360 = vmatpush2.msra.mxu0 0.0
        %1361 = vmatprep.subr.mxu0 0.0
        %1362 = vmatpush2.msra.mxu0 0.0
        %1363 = vmatprep.subr.mxu0 0.0
        %1364 = vmatpush2.msra.mxu0 0.0
        %1365 = vmatprep.subr.mxu0 0.0
        %1366 = vmatpush2.msra.mxu0 0.0
        %1367 = vmatprep.subr.mxu0 0.0
        %1368 = vmatpush2.msra.mxu0 0.0
        %1369 = vmatprep.subr.mxu0 0.0
        %1370 = vmatpush2.msra.mxu0 0.0
        %1371 = vmatprep.subr.mxu0 0.0
        %1372 = vmatpush2.msra.mxu0 0.0
        %1373 = vmatprep.subr.mxu0 0.0
        %1374 = vmatpush2.msra.mxu0 0.0
        %1375 = vmatprep.subr.mxu0 0.0
        %1376 = vmatpush2.msra.mxu0 0.0
        %1377 = vmatprep.subr.mxu0 0.0
        %1378 = vmatpush2.msra.mxu0 0.0
        %1379 = vmatprep.mubr.f32.mxu0 0.0
        %1380 = vmatmul.mubr.f32.gmra.mxu0 %v1144
        %v1381 = vpop.f32.mrf.mxu0
        %v1382 = vadd.f32 0.0, %v1381
        %v1383 = vpop.f32.mrf.mxu0
        %v1384 = vadd.f32 0.0, %v1383
        %1385 = vmatprep.mubr.f32.mxu0 0.0
        %1386 = vmatmul.mubr.f32.gmra.mxu0 %v1145
        %v1387 = vpop.f32.mrf.mxu0
        %v1388 = vadd.f32 0.0, %v1387
        %v1389 = vpop.f32.mrf.mxu0
        %v1390 = vadd.f32 0.0, %v1389
        %1391 = vdwg.mxu0
        %1392 = vmatprep.subr.mxu0 %v1234
        %1393 = vmatpush1.msra.mxu0 %v1233
        %1394 = vmatprep.subr.mxu0 %v1232
        %1395 = vmatpush1.msra.mxu0 %v1231
        %1396 = vmatprep.subr.mxu0 %v1230
        %1397 = vmatpush1.msra.mxu0 %v1229
        %1398 = vmatprep.subr.mxu0 %v1228
        %1399 = vmatpush1.msra.mxu0 %v1227
        %1400 = vmatprep.subr.mxu0 %v1226
        %1401 = vmatpush1.msra.mxu0 %v1225
        %1402 = vmatprep.subr.mxu0 %v1224
        %1403 = vmatpush1.msra.mxu0 %v1223
        %1404 = vmatprep.subr.mxu0 %v1222
        %1405 = vmatpush1.msra.mxu0 %v1221
        %1406 = vmatprep.subr.mxu0 %v1220
        %1407 = vmatpush1.msra.mxu0 %v1219
        %1408 = vmatprep.subr.mxu0 %v1218
        %1409 = vmatpush1.msra.mxu0 %v578
        %1410 = vmatprep.subr.mxu0 %v1217
        %1411 = vmatpush1.msra.mxu0 %v577
        %1412 = vmatprep.subr.mxu0 %v1216
        %1413 = vmatpush1.msra.mxu0 %v576
        %1414 = vmatprep.subr.mxu0 %v1215
        %1415 = vmatpush1.msra.mxu0 %v575
        %1416 = vmatprep.subr.mxu0 %v1214
        %1417 = vmatpush1.msra.mxu0 %v574
        %1418 = vmatprep.subr.mxu0 %v1213
        %1419 = vmatpush1.msra.mxu0 %v573
        %1420 = vmatprep.subr.mxu0 %v1212
        %1421 = vmatpush1.msra.mxu0 %v572
        %1422 = vmatprep.subr.mxu0 %v1211
        %1423 = vmatpush1.msra.mxu0 %v571
        %1424 = vmatprep.subr.mxu0 0.0
        %1425 = vmatpush2.msra.mxu0 0.0
        %1426 = vmatprep.subr.mxu0 0.0
        %1427 = vmatpush2.msra.mxu0 0.0
        %1428 = vmatprep.subr.mxu0 0.0
        %1429 = vmatpush2.msra.mxu0 0.0
        %1430 = vmatprep.subr.mxu0 0.0
        %1431 = vmatpush2.msra.mxu0 0.0
        %1432 = vmatprep.subr.mxu0 0.0
        %1433 = vmatpush2.msra.mxu0 0.0
        %1434 = vmatprep.subr.mxu0 0.0
        %1435 = vmatpush2.msra.mxu0 0.0
        %1436 = vmatprep.subr.mxu0 0.0
        %1437 = vmatpush2.msra.mxu0 0.0
        %1438 = vmatprep.subr.mxu0 0.0
        %1439 = vmatpush2.msra.mxu0 0.0
        %1440 = vmatprep.subr.mxu0 0.0
        %1441 = vmatpush2.msra.mxu0 0.0
        %1442 = vmatprep.subr.mxu0 0.0
        %1443 = vmatpush2.msra.mxu0 0.0
        %1444 = vmatprep.subr.mxu0 0.0
        %1445 = vmatpush2.msra.mxu0 0.0
        %1446 = vmatprep.subr.mxu0 0.0
        %1447 = vmatpush2.msra.mxu0 0.0
        %1448 = vmatprep.subr.mxu0 0.0
        %1449 = vmatpush2.msra.mxu0 0.0
        %1450 = vmatprep.subr.mxu0 0.0
        %1451 = vmatpush2.msra.mxu0 0.0
        %1452 = vmatprep.subr.mxu0 0.0
        %1453 = vmatpush2.msra.mxu0 0.0
        %1454 = vmatprep.subr.mxu0 0.0
        %1455 = vmatpush2.msra.mxu0 0.0
        %1456 = vmatprep.mubr.f32.mxu0 0.0
        %1457 = vmatmul.mubr.f32.gmra.mxu0 %v1142
        %v1458 = vpop.f32.mrf.mxu0
        %v1459 = vadd.f32 %v1382, %v1458
        %v1460 = vpop.f32.mrf.mxu0
        %v1461 = vadd.f32 %v1384, %v1460
        %1462 = vmatprep.mubr.f32.mxu0 0.0
        %1463 = vmatmul.mubr.f32.gmra.mxu0 %v1143
        %v1464 = vpop.f32.mrf.mxu0
        %v1465 = vadd.f32 %v1388, %v1464
        %v1466 = vpop.f32.mrf.mxu0
        %v1467 = vadd.f32 %v1390, %v1466
        %1468 = vdwg.mxu0
        %1473 = vrot.lane.b32.xlu0 %v1459, 1
        %v1474 = vpop.permute.xlu0 %1473
        %1475 = vrot.lane.b32.xlu0 %v1461, 1
        %v1476 = vpop.permute.xlu0 %1475
        %1477 = vrot.lane.b32.xlu0 %v1465, 1
        %v1478 = vpop.permute.xlu0 %1477
        %1479 = vrot.lane.b32.xlu0 %v1467, 1
        %v1480 = vpop.permute.xlu0 %1479
        %v1481 = vsel %vm795, %v1474, %v1476
        %v1482 = vsel %vm795, %v1478, %v1480
        %1489 = vst.msk [vmem:[#allocation3] sm:$0xff] %vm793, %v1474
        %1490 = vst [vmem:[#allocation3 + $0x8] sm:$0xff] %v1481
        %1491 = vst.msk [vmem:[#allocation3 + $0x10] sm:$0xff] %vm795, %v1476
        %1492 = vst.msk [vmem:[#allocation3 + $0x18] sm:$0xff] %vm793, %v1478
        %1493 = vst [vmem:[#allocation3 + $0x20] sm:$0xff] %v1482
        %1494 = vst.msk [vmem:[#allocation3 + $0x28] sm:$0xff] %vm795, %v1480
        %v1495 = vld [vmem:[#allocation3] sm:$0xff]
        %v1496 = vld [vmem:[#allocation3 + $0x8] sm:$0xff]
        %v1497 = vld [vmem:[#allocation3 + $0x18] sm:$0xff]
        %v1498 = vld [vmem:[#allocation3 + $0x20] sm:$0xff]
        %1499 = vst [vmem:[#allocation4] sm:$0xff] %v1495
        %1500 = vst [vmem:[#allocation4 + $0x8] sm:$0xff] %v1496
        %1501 = vst [vmem:[#allocation4 + $0x10] sm:$0xff] %v1497
        %1502 = vst [vmem:[#allocation4 + $0x18] sm:$0xff] %v1498
        %v1503 = vld [vmem:[#allocation3] sm:$0xff]
        %v1504 = vld [vmem:[#allocation3 + $0x8] sm:$0xff]
        %v1505 = vld [vmem:[#allocation3 + $0x10] sm:$0xff]
        %v1506 = vld [vmem:[#allocation3 + $0x18] sm:$0xff]
        %v1507 = vld [vmem:[#allocation3 + $0x20] sm:$0xff]
        %v1508 = vld [vmem:[#allocation3 + $0x28] sm:$0xff]
        %1515 = vrot.lane.b32.xlu0 %v1503, 127
        %v1516 = vpop.permute.xlu0 %1515
        %1517 = vrot.lane.b32.xlu0 %v1504, 127
        %v1518 = vpop.permute.xlu0 %1517
        %1519 = vrot.lane.b32.xlu0 %v1505, 127
        %v1520 = vpop.permute.xlu0 %1519
        %1521 = vrot.lane.b32.xlu0 %v1506, 127
        %v1522 = vpop.permute.xlu0 %1521
        %1523 = vrot.lane.b32.xlu0 %v1507, 127
        %v1524 = vpop.permute.xlu0 %1523
        %1525 = vrot.lane.b32.xlu0 %v1508, 127
        %v1526 = vpop.permute.xlu0 %1525
        %v1527 = vsel %vm819, %v1516, %v1518
        %v1528 = vsel %vm819, %v1518, %v1520
        %v1529 = vsel %vm819, %v1522, %v1524
        %v1530 = vsel %vm819, %v1524, %v1526
        %1535 = vst [vmem:[#allocation4 + $0x20] sm:$0xff] %v1527
        %1536 = vst [vmem:[#allocation4 + $0x28] sm:$0xff] %v1528
        %1537 = vst [vmem:[#allocation4 + $0x30] sm:$0xff] %v1529
        %1538 = vst [vmem:[#allocation4 + $0x38] sm:$0xff] %v1530
        %v1539 = vld [vmem:[#allocation3] sm:$0xff]
        %v1540 = vld [vmem:[#allocation3 + $0x8] sm:$0xff]
        %v1541 = vld [vmem:[#allocation3 + $0x10] sm:$0xff]
        %v1542 = vld [vmem:[#allocation3 + $0x18] sm:$0xff]
        %v1543 = vld [vmem:[#allocation3 + $0x20] sm:$0xff]
        %v1544 = vld [vmem:[#allocation3 + $0x28] sm:$0xff]
        %1551 = vrot.lane.b32.xlu0 %v1539, 126
        %v1552 = vpop.permute.xlu0 %1551
        %1553 = vrot.lane.b32.xlu0 %v1540, 126
        %v1554 = vpop.permute.xlu0 %1553
        %1555 = vrot.lane.b32.xlu0 %v1541, 126
        %v1556 = vpop.permute.xlu0 %1555
        %1557 = vrot.lane.b32.xlu0 %v1542, 126
        %v1558 = vpop.permute.xlu0 %1557
        %1559 = vrot.lane.b32.xlu0 %v1543, 126
        %v1560 = vpop.permute.xlu0 %1559
        %1561 = vrot.lane.b32.xlu0 %v1544, 126
        %v1562 = vpop.permute.xlu0 %1561
        %v1563 = vsel %vm842, %v1552, %v1554
        %v1564 = vsel %vm842, %v1554, %v1556
        %v1565 = vsel %vm842, %v1558, %v1560
        %v1566 = vsel %vm842, %v1560, %v1562
        %1571 = vst [vmem:[#allocation4 + $0x40] sm:$0xff] %v1563
        %1572 = vst [vmem:[#allocation4 + $0x48] sm:$0xff] %v1564
        %1573 = vst [vmem:[#allocation4 + $0x50] sm:$0xff] %v1565
        %1574 = vst [vmem:[#allocation4 + $0x58] sm:$0xff] %v1566
        %v1575 = vld [vmem:[%s8] sm:$0xff]
        %v1576 = vld [vmem:[%s8 + $0x8] sm:$0xff]
        %v1577 = vld [vmem:[#allocation4] sm:$0xff]
        %v1578 = vld [vmem:[#allocation4 + $0x8] sm:$0xff]
        %v1579 = vld [vmem:[#allocation4 + $0x10] sm:$0xff]
        %v1580 = vld [vmem:[#allocation4 + $0x18] sm:$0xff]
        %v1581 = vld [vmem:[#allocation4 + $0x20] sm:$0xff]
        %v1582 = vld [vmem:[#allocation4 + $0x28] sm:$0xff]
        %v1583 = vld [vmem:[#allocation4 + $0x30] sm:$0xff]
        %v1584 = vld [vmem:[#allocation4 + $0x38] sm:$0xff]
        %v1585 = vld [vmem:[#allocation4 + $0x40] sm:$0xff]
        %v1586 = vld [vmem:[#allocation4 + $0x48] sm:$0xff]
        %v1587 = vld [vmem:[#allocation4 + $0x50] sm:$0xff]
        %v1588 = vld [vmem:[#allocation4 + $0x58] sm:$0xff]
        %v1589 = vld [vmem:[%s9] sm:$0xff]
        %v1590 = vld [vmem:[%s9 + $0x8] sm:$0xff]
        %1592 = vset.pattern.permute.xlu0 0
        %1593 = vperm.xlu0 %1592, %v1589
        %v1594 = vpop.permute.xlu0 %1593
        %1597 = vset.pattern.permute.xlu0 0
        %1598 = vperm.xlu0 %1597, %v1590
        %v1599 = vpop.permute.xlu0 %1598
        %v1602 = vsel %vm869, %v1575, 0
        %v1605 = vsel %vm869, %v1576, 0
        %1607 = vmatprep.subr.mxu0 0.0
        %1608 = vmatpush1.msra.mxu0 0.0
        %1609 = vmatprep.subr.mxu0 0.0
        %1610 = vmatpush1.msra.mxu0 0.0
        %1611 = vmatprep.subr.mxu0 0.0
        %1612 = vmatpush1.msra.mxu0 0.0
        %1613 = vmatprep.subr.mxu0 0.0
        %1614 = vmatpush1.msra.mxu0 0.0
        %1615 = vmatprep.subr.mxu0 0.0
        %1616 = vmatpush1.msra.mxu0 0.0
        %1617 = vmatprep.subr.mxu0 0.0
        %1618 = vmatpush1.msra.mxu0 0.0
        %1619 = vmatprep.subr.mxu0 0.0
        %1620 = vmatpush1.msra.mxu0 0.0
        %1621 = vmatprep.subr.mxu0 0.0
        %1622 = vmatpush1.msra.mxu0 0.0
        %1623 = vmatprep.subr.mxu0 0.0
        %1624 = vmatpush1.msra.mxu0 0.0
        %1625 = vmatprep.subr.mxu0 0.0
        %1626 = vmatpush1.msra.mxu0 0.0
        %1627 = vmatprep.subr.mxu0 %v1588
        %1628 = vmatpush1.msra.mxu0 %v1587
        %1629 = vmatprep.subr.mxu0 %v1586
        %1630 = vmatpush1.msra.mxu0 %v1585
        %1631 = vmatprep.subr.mxu0 %v1584
        %1632 = vmatpush1.msra.mxu0 %v1583
        %1633 = vmatprep.subr.mxu0 %v1582
        %1634 = vmatpush1.msra.mxu0 %v1581
        %1635 = vmatprep.subr.mxu0 %v1580
        %1636 = vmatpush1.msra.mxu0 %v1579
        %1637 = vmatprep.subr.mxu0 %v1578
        %1638 = vmatpush1.msra.mxu0 %v1577
        %1639 = vmatprep.subr.mxu0 0.0
        %1640 = vmatpush2.msra.mxu0 0.0
        %1641 = vmatprep.subr.mxu0 0.0
        %1642 = vmatpush2.msra.mxu0 0.0
        %1643 = vmatprep.subr.mxu0 0.0
        %1644 = vmatpush2.msra.mxu0 0.0
        %1645 = vmatprep.subr.mxu0 0.0
        %1646 = vmatpush2.msra.mxu0 0.0
        %1647 = vmatprep.subr.mxu0 0.0
        %1648 = vmatpush2.msra.mxu0 0.0
        %1649 = vmatprep.subr.mxu0 0.0
        %1650 = vmatpush2.msra.mxu0 0.0
        %1651 = vmatprep.subr.mxu0 0.0
        %1652 = vmatpush2.msra.mxu0 0.0
        %1653 = vmatprep.subr.mxu0 0.0
        %1654 = vmatpush2.msra.mxu0 0.0
        %1655 = vmatprep.subr.mxu0 0.0
        %1656 = vmatpush2.msra.mxu0 0.0
        %1657 = vmatprep.subr.mxu0 0.0
        %1658 = vmatpush2.msra.mxu0 0.0
        %1659 = vmatprep.subr.mxu0 0.0
        %1660 = vmatpush2.msra.mxu0 0.0
        %1661 = vmatprep.subr.mxu0 0.0
        %1662 = vmatpush2.msra.mxu0 0.0
        %1663 = vmatprep.subr.mxu0 0.0
        %1664 = vmatpush2.msra.mxu0 0.0
        %1665 = vmatprep.subr.mxu0 0.0
        %1666 = vmatpush2.msra.mxu0 0.0
        %1667 = vmatprep.subr.mxu0 0.0
        %1668 = vmatpush2.msra.mxu0 0.0
        %1669 = vmatprep.subr.mxu0 0.0
        %1670 = vmatpush2.msra.mxu0 0.0
        %1671 = vmatprep.mubr.f32.mxu0 0.0
        %1672 = vmatmul.mubr.f32.gmra.mxu0 %v1602
        %v1673 = vpop.f32.mrf.mxu0
        %v1674 = vadd.f32 %v1594, %v1673
        %v1675 = vpop.f32.mrf.mxu0
        %v1676 = vadd.f32 %v1594, %v1675
        %1677 = vmatprep.mubr.f32.mxu0 0.0
        %1678 = vmatmul.mubr.f32.gmra.mxu0 %v1605
        %v1679 = vpop.f32.mrf.mxu0
        %v1680 = vadd.f32 %v1599, %v1679
        %v1681 = vpop.f32.mrf.mxu0
        %v1682 = vadd.f32 %v1599, %v1681
        %1683 = vdwg.mxu0
        %1688 = vrot.lane.b32.xlu0 %v1674, 1
        %v1689 = vpop.permute.xlu0 %1688
        %1690 = vrot.lane.b32.xlu0 %v1676, 1
        %v1691 = vpop.permute.xlu0 %1690
        %1692 = vrot.lane.b32.xlu0 %v1680, 1
        %v1693 = vpop.permute.xlu0 %1692
        %1694 = vrot.lane.b32.xlu0 %v1682, 1
        %v1695 = vpop.permute.xlu0 %1694
        %v1696 = vsel %vm795, %v1689, %v1691
        %v1697 = vsel %vm795, %v1693, %v1695
        %1704 = vst.msk [vmem:[#allocation3] sm:$0xff] %vm793, %v1689
        %1705 = vst [vmem:[#allocation3 + $0x8] sm:$0xff] %v1696
        %1706 = vst.msk [vmem:[#allocation3 + $0x10] sm:$0xff] %vm795, %v1691
        %1707 = vst.msk [vmem:[#allocation3 + $0x18] sm:$0xff] %vm793, %v1693
        %1708 = vst [vmem:[#allocation3 + $0x20] sm:$0xff] %v1697
        %1709 = vst.msk [vmem:[#allocation3 + $0x28] sm:$0xff] %vm795, %v1695
        %v1710 = vld [vmem:[#allocation3] sm:$0xff]
        %v1711 = vld [vmem:[#allocation3 + $0x8] sm:$0xff]
        %v1712 = vld [vmem:[#allocation3 + $0x18] sm:$0xff]
        %v1713 = vld [vmem:[#allocation3 + $0x20] sm:$0xff]
        %1714 = vst [vmem:[#allocation4] sm:$0xff] %v1710
        %1715 = vst [vmem:[#allocation4 + $0x8] sm:$0xff] %v1711
        %1716 = vst [vmem:[#allocation4 + $0x10] sm:$0xff] %v1712
        %1717 = vst [vmem:[#allocation4 + $0x18] sm:$0xff] %v1713
        %v1718 = vld [vmem:[#allocation3] sm:$0xff]
        %v1719 = vld [vmem:[#allocation3 + $0x8] sm:$0xff]
        %v1720 = vld [vmem:[#allocation3 + $0x10] sm:$0xff]
        %v1721 = vld [vmem:[#allocation3 + $0x18] sm:$0xff]
        %v1722 = vld [vmem:[#allocation3 + $0x20] sm:$0xff]
        %v1723 = vld [vmem:[#allocation3 + $0x28] sm:$0xff]
        %1730 = vrot.lane.b32.xlu0 %v1718, 127
        %v1731 = vpop.permute.xlu0 %1730
        %1732 = vrot.lane.b32.xlu0 %v1719, 127
        %v1733 = vpop.permute.xlu0 %1732
        %1734 = vrot.lane.b32.xlu0 %v1720, 127
        %v1735 = vpop.permute.xlu0 %1734
        %1736 = vrot.lane.b32.xlu0 %v1721, 127
        %v1737 = vpop.permute.xlu0 %1736
        %1738 = vrot.lane.b32.xlu0 %v1722, 127
        %v1739 = vpop.permute.xlu0 %1738
        %1740 = vrot.lane.b32.xlu0 %v1723, 127
        %v1741 = vpop.permute.xlu0 %1740
        %v1742 = vsel %vm819, %v1731, %v1733
        %v1743 = vsel %vm819, %v1733, %v1735
        %v1744 = vsel %vm819, %v1737, %v1739
        %v1745 = vsel %vm819, %v1739, %v1741
        %1750 = vst [vmem:[#allocation4 + $0x20] sm:$0xff] %v1742
        %1751 = vst [vmem:[#allocation4 + $0x28] sm:$0xff] %v1743
        %1752 = vst [vmem:[#allocation4 + $0x30] sm:$0xff] %v1744
        %1753 = vst [vmem:[#allocation4 + $0x38] sm:$0xff] %v1745
        %v1754 = vld [vmem:[#allocation3] sm:$0xff]
        %v1755 = vld [vmem:[#allocation3 + $0x8] sm:$0xff]
        %v1756 = vld [vmem:[#allocation3 + $0x10] sm:$0xff]
        %v1757 = vld [vmem:[#allocation3 + $0x18] sm:$0xff]
        %v1758 = vld [vmem:[#allocation3 + $0x20] sm:$0xff]
        %v1759 = vld [vmem:[#allocation3 + $0x28] sm:$0xff]
        %1766 = vrot.lane.b32.xlu0 %v1754, 126
        %v1767 = vpop.permute.xlu0 %1766
        %1768 = vrot.lane.b32.xlu0 %v1755, 126
        %v1769 = vpop.permute.xlu0 %1768
        %1770 = vrot.lane.b32.xlu0 %v1756, 126
        %v1771 = vpop.permute.xlu0 %1770
        %1772 = vrot.lane.b32.xlu0 %v1757, 126
        %v1773 = vpop.permute.xlu0 %1772
        %1774 = vrot.lane.b32.xlu0 %v1758, 126
        %v1775 = vpop.permute.xlu0 %1774
        %1776 = vrot.lane.b32.xlu0 %v1759, 126
        %v1777 = vpop.permute.xlu0 %1776
        %v1778 = vsel %vm842, %v1767, %v1769
        %v1779 = vsel %vm842, %v1769, %v1771
        %v1780 = vsel %vm842, %v1773, %v1775
        %v1781 = vsel %vm842, %v1775, %v1777
        %1786 = vst [vmem:[#allocation4 + $0x40] sm:$0xff] %v1778
        %1787 = vst [vmem:[#allocation4 + $0x48] sm:$0xff] %v1779
        %1788 = vst [vmem:[#allocation4 + $0x50] sm:$0xff] %v1780
        %1789 = vst [vmem:[#allocation4 + $0x58] sm:$0xff] %v1781
        %v1790 = vld [vmem:[%s10] sm:$0x1]
        %v1791 = vld [vmem:[#allocation4] sm:$0xff]
        %v1792 = vld [vmem:[#allocation4 + $0x8] sm:$0xff]
        %v1793 = vld [vmem:[#allocation4 + $0x10] sm:$0xff]
        %v1794 = vld [vmem:[#allocation4 + $0x18] sm:$0xff]
        %v1795 = vld [vmem:[#allocation4 + $0x20] sm:$0xff]
        %v1796 = vld [vmem:[#allocation4 + $0x28] sm:$0xff]
        %v1797 = vld [vmem:[#allocation4 + $0x30] sm:$0xff]
        %v1798 = vld [vmem:[#allocation4 + $0x38] sm:$0xff]
        %v1799 = vld [vmem:[#allocation4 + $0x40] sm:$0xff]
        %v1800 = vld [vmem:[#allocation4 + $0x48] sm:$0xff]
        %v1801 = vld [vmem:[#allocation4 + $0x50] sm:$0xff]
        %v1802 = vld [vmem:[#allocation4 + $0x58] sm:$0xff]
        %v1803 = vld [vmem:[#allocation5] sm:$0x1]
        %1805 = vset.pattern.permute.xlu0 0
        %1806 = vperm.xlu0 %1805, %v1803
        %v1807 = vpop.permute.xlu0 %1806
        %v1809 = vlaneseq
        %v1810 = vshrl.u32 %v1809, 7
        %v1811 = vsub.s32 0, %v1810
        %v1812 = vrot.slane %v1807, %v1811
        %v1814 = vsel %vm869, %v1790, 0
        %1816 = vmatprep.subr.mxu0 0.0
        %1817 = vmatpush1.msra.mxu0 0.0
        %1818 = vmatprep.subr.mxu0 0.0
        %1819 = vmatpush1.msra.mxu0 0.0
        %1820 = vmatprep.subr.mxu0 0.0
        %1821 = vmatpush1.msra.mxu0 0.0
        %1822 = vmatprep.subr.mxu0 0.0
        %1823 = vmatpush1.msra.mxu0 0.0
        %1824 = vmatprep.subr.mxu0 0.0
        %1825 = vmatpush1.msra.mxu0 0.0
        %1826 = vmatprep.subr.mxu0 0.0
        %1827 = vmatpush1.msra.mxu0 0.0
        %1828 = vmatprep.subr.mxu0 0.0
        %1829 = vmatpush1.msra.mxu0 0.0
        %1830 = vmatprep.subr.mxu0 0.0
        %1831 = vmatpush1.msra.mxu0 0.0
        %1832 = vmatprep.subr.mxu0 0.0
        %1833 = vmatpush1.msra.mxu0 0.0
        %1834 = vmatprep.subr.mxu0 0.0
        %1835 = vmatpush1.msra.mxu0 0.0
        %1836 = vmatprep.subr.mxu0 %v1802
        %1837 = vmatpush1.msra.mxu0 %v1801
        %1838 = vmatprep.subr.mxu0 %v1800
        %1839 = vmatpush1.msra.mxu0 %v1799
        %1840 = vmatprep.subr.mxu0 %v1798
        %1841 = vmatpush1.msra.mxu0 %v1797
        %1842 = vmatprep.subr.mxu0 %v1796
        %1843 = vmatpush1.msra.mxu0 %v1795
        %1844 = vmatprep.subr.mxu0 %v1794
        %1845 = vmatpush1.msra.mxu0 %v1793
        %1846 = vmatprep.subr.mxu0 %v1792
        %1847 = vmatpush1.msra.mxu0 %v1791
        %1848 = vmatprep.subr.mxu0 0.0
        %1849 = vmatpush2.msra.mxu0 0.0
        %1850 = vmatprep.subr.mxu0 0.0
        %1851 = vmatpush2.msra.mxu0 0.0
        %1852 = vmatprep.subr.mxu0 0.0
        %1853 = vmatpush2.msra.mxu0 0.0
        %1854 = vmatprep.subr.mxu0 0.0
        %1855 = vmatpush2.msra.mxu0 0.0
        %1856 = vmatprep.subr.mxu0 0.0
        %1857 = vmatpush2.msra.mxu0 0.0
        %1858 = vmatprep.subr.mxu0 0.0
        %1859 = vmatpush2.msra.mxu0 0.0
        %1860 = vmatprep.subr.mxu0 0.0
        %1861 = vmatpush2.msra.mxu0 0.0
        %1862 = vmatprep.subr.mxu0 0.0
        %1863 = vmatpush2.msra.mxu0 0.0
        %1864 = vmatprep.subr.mxu0 0.0
        %1865 = vmatpush2.msra.mxu0 0.0
        %1866 = vmatprep.subr.mxu0 0.0
        %1867 = vmatpush2.msra.mxu0 0.0
        %1868 = vmatprep.subr.mxu0 0.0
        %1869 = vmatpush2.msra.mxu0 0.0
        %1870 = vmatprep.subr.mxu0 0.0
        %1871 = vmatpush2.msra.mxu0 0.0
        %1872 = vmatprep.subr.mxu0 0.0
        %1873 = vmatpush2.msra.mxu0 0.0
        %1874 = vmatprep.subr.mxu0 0.0
        %1875 = vmatpush2.msra.mxu0 0.0
        %1876 = vmatprep.subr.mxu0 0.0
        %1877 = vmatpush2.msra.mxu0 0.0
        %1878 = vmatprep.subr.mxu0 0.0
        %1879 = vmatpush2.msra.mxu0 0.0
        %1880 = vmatprep.mubr.f32.mxu0 0.0
        %1881 = vmatmul.mubr.f32.gmra.mxu0 %v1814
        %v1882 = vpop.f32.mrf.mxu0
        %v1883 = vadd.f32 %v1812, %v1882
        %v1884 = vpop.f32.mrf.mxu0
        %v1885 = vadd.f32 %v1812, %v1884
        %1886 = vdwg.mxu0
        %v1889 = vcombine.low %v1883, %v1885
        %v1891 = vunpack.c.l.s4 1966171168
        %v1892 = vunpack.c.0.s8 %v1891
        %v1893 = vlaneseq
        %v1894 = vshrl.u32 %v1893, 7
        %v1895 = vsub.s32 %v1892, %v1894
        %v1896 = vrot.slane %v1889, %v1895
        %v1898 = vunpack.c.l.s4 1966171168
        %v1899 = vunpack.c.0.s8 %v1898
        %v1900 = vlaneseq
        %v1901 = vshrl.u32 %v1900, 7
        %v1902 = vsub.s32 %v1899, %v1901
        %v1903 = vrot.slane %v1896, %v1902
        %v1905 = vlaneseq
        %vm1906 = vcmp.ge.s32.totalorder %v1905, 0
        %vm1907 = vcmp.lt.s32.totalorder %v1905, 256
        %vm1908 = vmand %vm1906, %vm1907
        %1909 = vst.msk [vmem:[%s404] sm:$0x3] %vm1908, %v1903
        %s1910 = sand.u32 %s293, 1
        %s1911 = scalar_lea.sflag [#allocation7], %s1910
        %s1912 = sand.u32 %s293, 1
        %s1913 = smul.addr %s1912, 2
        %s1914 = scalar_lea.vmem [#allocation6], %s1913
        // Predicated region
        $region69: #{my_decoder_forward.1} parent=67 // pred_check
          %p1915 = pneg %p303
        $region70: #{my_decoder_forward.1} parent=67 // pred_check_branch
          %1917 = sbr.rel (%p1915) target = $region72
        $region71: #{my_decoder_forward.1} parent=67 // pred_region
          %s1919 = ssub.s32 32, 32
          %1920 = vsyncadd %s1911, %s1919
          %s1921 = smul.addr %s28, 2
          %s1922 = smul.addr %s1921, 16
          %s1923 = scalar_lea.hbm %s12, %s1922
          %s1925 = sshll.u32 %s1914, 4
          %s1926 = int_to_ptr.vmem [resolvable:$true] %s1925
          %1928 = dma.vmem_to_hbm [thread:$0]  %s1926, 32, %s1923, %s1911
        $region72: #{my_decoder_forward.1} parent=67 // pred_fallthru
          _
      $region68: #{my_decoder_forward.1} parent=5 // pred_fallthru
        _
      %p1929 = scmp.le.s32.totalorder 2, %s23
      // Predicated region
      $region73: #{my_decoder_forward.1} parent=5 // pred_check
        %p1930 = pneg %p1929
      $region74: #{my_decoder_forward.1} parent=5 // pred_check_branch
        %1932 = sbr.rel (%p1930) target = $region76
      $region75: #{my_decoder_forward.1} parent=5 // pred_region
        %s1933 = ssub.s32 %s23, 2
        // Predicated region
        $region77: #{my_decoder_forward.1} parent=75 // pred_check
          %p1934 = pneg %p309
        $region78: #{my_decoder_forward.1} parent=75 // pred_check_branch
          %1936 = sbr.rel (%p1934) target = $region80
        $region79: #{my_decoder_forward.1} parent=75 // pred_region
          %s1937 = sand.u32 %s294, 1
          %s1938 = scalar_lea.sflag [#allocation7], %s1937
          %s1939 = sand.u32 %s294, 1
          %s1940 = smul.addr %s1939, 2
          %s1941 = scalar_lea.vmem [#allocation6], %s1940
          %1942 = dma.done %s1938, 32
        $region80: #{my_decoder_forward.1} parent=75 // pred_fallthru
          _
      $region76: #{my_decoder_forward.1} parent=5 // pred_fallthru
        _
    $region6: #{my_decoder_forward.1} parent=1 // loop_footer
      %s27 = sadd.s32 1, %s23
    $region7: #{my_decoder_forward.1} parent=1 // loop_footer_branch
      %22 = sbr.rel target = $region3
    $region8: #{my_decoder_forward.1} parent=1 // loop_exit
      _
    %1943 = vsyncpa [#allocation7], 1
    %s1944 = scalar_lea.sflag [#allocation7], 1
    %1945 = vsyncpa %s1944, 1

</llo_original>
